<compile_context>
chip_gen: v7x
topology: tpu7x:2x2x1
jax: 0.10.0
libtpu: 0.0.40
codegen_flags: <defaults>
</compile_context>

<pallas_src>
import functools

import jax
import jax.numpy as jnp
import numpy as np
from jax.experimental import pallas as pl
from jax.experimental.pallas import tpu as pltpu

_EPS = 1e-5    # nn.BatchNorm1d default eps
_EDGE = 4      # per-row zero pad baked into the packed layout (>= max 'same' pad 3/4)


# ---------------------------------------------------------------------------
# Kernels
# ---------------------------------------------------------------------------
def _conv_stats_kernel(K, lk, apply_bn_relu,
                       a_ref, scale_ref, bias_ref, w_ref, mask_ref,
                       pre_ref, stats_ref, s1_ref, s2_ref):
    """One conv stage on a lane-packed (C, TB*S) slab + per-channel (sum, sumsq)."""
    t = pl.program_id(1)

    @pl.when(t == 0)
    def _init():
        s1_ref[...] = jnp.zeros_like(s1_ref)
        s2_ref[...] = jnp.zeros_like(s2_ref)

    n_lane = a_ref.shape[1]

    if apply_bn_relu:
        # Fused BN (pre-folded scale/bias) + ReLU in f32; re-zero the pad columns
        # (bias would otherwise leak into the conv 'same' padding); cast once to bf16.
        a32 = a_ref[...].astype(jnp.float32)
        act = jnp.maximum(a32 * scale_ref[...] + bias_ref[...], 0.0) * mask_ref[...]
        act16 = act.astype(jnp.bfloat16)
    else:
        act16 = a_ref[...]                        # stage 1: packed x already zero-padded bf16

    cin = act16.shape[0]
    # Small edge extension so all K statically-shifted windows stay in-bounds; the
    # columns it can influence are masked pad columns of the first/last row anyway.
    ext = jnp.zeros((cin, _EDGE), jnp.bfloat16)
    ap = jnp.concatenate([ext, act16, ext], axis=1)
    xim = jnp.concatenate(
        [ap[:, _EDGE - lk + k:_EDGE - lk + k + n_lane] for k in range(K)], axis=0)

    pre = jnp.dot(w_ref[...], xim, preferred_element_type=jnp.float32)   # (Cout, TB*S)
    pre = pre * mask_ref[...]                     # zero the per-row pad columns

    # Lane-wise stats accumulation (VPU adds only); reduced once at the final step.
    s1_ref[...] += pre
    s2_ref[...] += pre * pre
    pre_ref[...] = pre.astype(pre_ref.dtype)      # bf16 intermediate -> HBM

    @pl.when(t == pl.num_programs(1) - 1)
    def _flush_stats():
        stats_ref[0, :, :] = jnp.concatenate(
            [jnp.sum(s1_ref[...], axis=-1, keepdims=True),
             jnp.sum(s2_ref[...], axis=-1, keepdims=True)], axis=-1)


def _final_kernel(pre_ref, scale_ref, bias_ref, x_ref, wsc_ref, o_ref):
    """Last BN + ReLU plus the Conv1d(k=1) shortcut (pointwise matmul), packed layout."""
    y = jnp.maximum(pre_ref[...].astype(jnp.float32) * scale_ref[...] + bias_ref[...], 0.0)
    sc = jnp.dot(wsc_ref[...], x_ref[...], preferred_element_type=jnp.float32)
    o_ref[...] = (y + sc).astype(o_ref.dtype)


# ---------------------------------------------------------------------------
# Host-side helpers
# ---------------------------------------------------------------------------
def _bn_scale_bias(stats_per_core, gamma, beta, count):
    """Fold training-mode BN into per-channel (scale, bias); stats: (NC, C, 2)."""
    stats = jnp.sum(stats_per_core, axis=0)                 # reduce per-core partials
    mean = stats[:, 0] / count
    var = jnp.maximum(stats[:, 1] / count - mean * mean, 0.0)   # biased variance
    scale = gamma * jax.lax.rsqrt(var + _EPS)
    bias = beta - mean * scale
    return scale[:, None].astype(jnp.float32), bias[:, None].astype(jnp.float32)


def _pick_tb(b, s, lane_target=2048):
    """Batch rows per lane tile.  Whole batch if it fits the lane budget; otherwise
    the largest divisor of b whose packed width is a 128-lane multiple."""
    if b * s <= lane_target:
        return b
    best = 0
    for tb in range(1, b + 1):
        if b % tb == 0 and tb * s <= lane_target and (tb * s) % 128 == 0:
            best = tb
    if best == 0:
        for tb in range(1, b + 1):          # fallback: largest divisor within budget
            if b % tb == 0 and tb * s <= lane_target:
                best = tb
    return max(best, 1)


def residual_block(x_ncl, params):
    """x_ncl: (B, Cin, L) float32 (PyTorch NCL).  Returns (B, Cout, L) float32."""
    B, Cin, L = x_ncl.shape
    Cout = params["w1"].shape[0]
    S = L + 2 * _EDGE                              # per-row packed segment length
    TB = _pick_tb(B, S)
    NTOT = B // TB                                 # number of lane tiles
    NC = 2 if (NTOT % 2 == 0 and NTOT >= 2) else 1  # core-split of the tile grid (v7x)
    TPC = NTOT // NC
    TBS = TB * S
    count = jnp.float32(B * L)

    # ---- layout plumbing (one-time): pack x into a lane-dense (Cin, B*S) bf16 slab.
    xp = jnp.pad(x_ncl, ((0, 0), (0, 0), (_EDGE, _EDGE)))          # (B, Cin, S)
    xp = jnp.transpose(xp, (1, 0, 2)).reshape(Cin, B * S).astype(jnp.bfloat16)

    lane = jnp.arange(S)
    row_mask = ((lane >= _EDGE) & (lane < _EDGE + L)).astype(jnp.float32)
    mask = jnp.tile(row_mask, TB).reshape(1, TBS)                  # 1 = data, 0 = pad

    def prep_w(w):                      # (Cout, Cin, K) -> (Cout, K*Cin) bf16, k-major rows
        co, ci, k = w.shape
        return jnp.transpose(w, (0, 2, 1)).reshape(co, k * ci).astype(jnp.bfloat16)

    w1m, w2m, w3m = prep_w(params["w1"]), prep_w(params["w2"]), prep_w(params["w3"])
    wscm = params["wsc"][:, :, 0].astype(jnp.bfloat16)             # (Cout, Cin)

    def stage(a_packed, cin_s, scale, bias, wm, K, apply_bn_relu):
        kern = functools.partial(_conv_stats_kernel, K, (K - 1) // 2, apply_bn_relu)
        lane_map = lambda c, t: (0, c * TPC + t)
        fixed = lambda c, t: (0, 0)
        return pl.pallas_call(
            kern,
            grid=(NC, TPC),
            in_specs=[
                pl.BlockSpec((cin_s, TBS), lane_map),          # packed activation tile
                pl.BlockSpec((cin_s, 1), fixed),               # folded BN scale
                pl.BlockSpec((cin_s, 1), fixed),               # folded BN bias
                pl.BlockSpec((Cout, K * cin_s), fixed),        # im2col weight
                pl.BlockSpec((1, TBS), fixed),                 # data/pad lane mask
            ],
            out_specs=(
                pl.BlockSpec((Cout, TBS), lane_map),           # pre-BN conv out (bf16)
                pl.BlockSpec((1, Cout, 2), lambda c, t: (c, 0, 0)),  # per-core stats
            ),
            out_shape=(
                jax.ShapeDtypeStruct((Cout, B * S), jnp.bfloat16),
                jax.ShapeDtypeStruct((NC, Cout, 2), jnp.float32),
            ),
            scratch_shapes=[pltpu.VMEM((Cout, TBS), jnp.float32),
                            pltpu.VMEM((Cout, TBS), jnp.float32)],
            compiler_params=pltpu.CompilerParams(
                dimension_semantics=("parallel", "arbitrary")),
        )(a_packed, scale, bias, wm, mask)

    ones = jnp.ones((Cin, 1), jnp.float32)       # stage 1 has no input BN
    zeros = jnp.zeros((Cin, 1), jnp.float32)

    pre1, st1 = stage(xp, Cin, ones, zeros, w1m, 8, False)
    sc1, bi1 = _bn_scale_bias(st1, params["g1"], params["b1"], count)
    pre2, st2 = stage(pre1, Cout, sc1, bi1, w2m, 5, True)
    sc2, bi2 = _bn_scale_bias(st2, params["g2"], params["b2"], count)
    pre3, st3 = stage(pre2, Cout, sc2, bi2, w3m, 3, True)
    sc3, bi3 = _bn_scale_bias(st3, params["g3"], params["b3"], count)

    outp = pl.pallas_call(
        _final_kernel,
        grid=(NTOT,),
        in_specs=[
            pl.BlockSpec((Cout, TBS), lambda t: (0, t)),
            pl.BlockSpec((Cout, 1), lambda t: (0, 0)),
            pl.BlockSpec((Cout, 1), lambda t: (0, 0)),
            pl.BlockSpec((Cin, TBS), lambda t: (0, t)),
            pl.BlockSpec((Cout, Cin), lambda t: (0, 0)),
        ],
        out_specs=pl.BlockSpec((Cout, TBS), lambda t: (0, t)),
        out_shape=jax.ShapeDtypeStruct((Cout, B * S), jnp.float32),
        compiler_params=pltpu.CompilerParams(dimension_semantics=("parallel",)),
    )(pre3, sc3, bi3, xp, wscm)

    # Unpack: (Cout, B*S) -> (B, Cout, L) (drop the baked-in pad columns).
    out = outp.reshape(Cout, B, S)[:, :, _EDGE:_EDGE + L]
    return jnp.transpose(out, (1, 0, 2))


# ---------------------------------------------------------------------------
# Pure-JAX f32 reference (independent of the kernel's packed im2col formulation)
# ---------------------------------------------------------------------------
def _reference(x_ncl, params):
    def conv(x, w, pad_l, pad_r):
        return jax.lax.conv_general_dilated(
            x, w, (1,), [(pad_l, pad_r)],
            dimension_numbers=("NCH", "OIH", "NCH"),
            precision=jax.lax.Precision.HIGHEST)

    def bn(y, g, b):
        mean = jnp.mean(y, axis=(0, 2), keepdims=True)
        var = jnp.mean((y - mean) ** 2, axis=(0, 2), keepdims=True)
        return ((y - mean) * jax.lax.rsqrt(var + _EPS)
                * g.reshape(1, -1, 1) + b.reshape(1, -1, 1))

    y = jax.nn.relu(bn(conv(x_ncl, params["w1"], 3, 4), params["g1"], params["b1"]))
    y = jax.nn.relu(bn(conv(y,     params["w2"], 2, 2), params["g2"], params["b2"]))
    y = jax.nn.relu(bn(conv(y,     params["w3"], 1, 1), params["g3"], params["b3"]))
    return y + conv(x_ncl, params["wsc"], 0, 0)


# ---------------------------------------------------------------------------
if __name__ == "__main__":
    B, Cin, Cout, L = 2, 4, 8, 16

    key = jax.random.PRNGKey(0)
    ks = jax.random.split(key, 11)

    def conv_w(k, cout, cin, K):          # PyTorch Conv1d weight layout (O, I, K)
        return jax.random.normal(k, (cout, cin, K), jnp.float32) / np.sqrt(cin * K)

    params = {
        "w1": conv_w(ks[0], Cout, Cin, 8),
        "g1": 1.0 + 0.1 * jax.random.normal(ks[1], (Cout,), jnp.float32),
        "b1": 0.1 * jax.random.normal(ks[2], (Cout,), jnp.float32),
        "w2": conv_w(ks[3], Cout, Cout, 5),
        "g2": 1.0 + 0.1 * jax.random.normal(ks[4], (Cout,), jnp.float32),
        "b2": 0.1 * jax.random.normal(ks[5], (Cout,), jnp.float32),
        "w3": conv_w(ks[6], Cout, Cout, 3),
        "g3": 1.0 + 0.1 * jax.random.normal(ks[7], (Cout,), jnp.float32),
        "b3": 0.1 * jax.random.normal(ks[8], (Cout,), jnp.float32),
        "wsc": jax.random.normal(ks[9], (Cout, Cin, 1), jnp.float32) / np.sqrt(Cin),
    }
    x = jax.random.normal(ks[10], (B, Cin, L), jnp.float32)

    residual_block_jit = jax.jit(residual_block)
    out = jax.block_until_ready(residual_block_jit(x, params))
    assert out.shape == (B, Cout, L)

    ref = _reference(x, params)
    out_np, ref_np = np.asarray(out), np.asarray(ref)
    # Tolerances sized for bf16 MXU inputs + bf16 intermediates across three
    # BN-renormalized conv stages (vs. an f32 HIGHEST-precision reference).
    max_err = float(np.max(np.abs(out_np - ref_np)))
    rel_rms = float(np.sqrt(np.mean((out_np - ref_np) ** 2))
                    / (np.sqrt(np.mean(ref_np ** 2)) + 1e-12))
    if not (np.allclose(out_np, ref_np, atol=1e-1, rtol=5e-2) and rel_rms < 2e-2):
        raise AssertionError(
            f"Pallas output does not match JAX reference "
            f"(max_abs_err={max_err:.4f}, rel_rms={rel_rms:.4f})")

    print("KERNEL_OK")
</pallas_src>

<mosaic_0001>
module attributes {stable_mosaic.version = 11 : i64} {
  func.func @_conv_stats_kernel(%arg0: i32, %arg1: i32, %arg2: memref<4x48xbf16, #tpu.memory_space<vmem>>, %arg3: memref<4x1xf32, #tpu.memory_space<vmem>>, %arg4: memref<4x1xf32, #tpu.memory_space<vmem>>, %arg5: memref<8x32xbf16, #tpu.memory_space<vmem>>, %arg6: memref<1x48xf32, #tpu.memory_space<vmem>>, %arg7: memref<8x48xbf16, #tpu.memory_space<vmem>>, %arg8: memref<1x8x2xf32, #tpu.memory_space<vmem>>, %arg9: memref<8x48xf32, #tpu.memory_space<vmem>>, %arg10: memref<8x48xf32, #tpu.memory_space<vmem>>) attributes {dimension_semantics = [#tpu.dimension_semantics<parallel>, #tpu.dimension_semantics<arbitrary>], iteration_bounds = array<i64: 1, 1>, scalar_prefetch = 0 : i64, scratch_operands = 2 : i64, tpu.core_type = #tpu.core_type<tc>, window_params = [{transform_indices = @transform_0, window_bounds = array<i64: 4, 48>}, {pipeline_mode = #tpu.pipeline_mode<synchronous>, transform_indices = @transform_1, window_bounds = array<i64: 4, 1>}, {pipeline_mode = #tpu.pipeline_mode<synchronous>, transform_indices = @transform_2, window_bounds = array<i64: 4, 1>}, {pipeline_mode = #tpu.pipeline_mode<synchronous>, transform_indices = @transform_3, window_bounds = array<i64: 8, 32>}, {pipeline_mode = #tpu.pipeline_mode<synchronous>, transform_indices = @transform_4, window_bounds = array<i64: 1, 48>}, {transform_indices = @transform_5, window_bounds = array<i64: 8, 48>}, {transform_indices = @transform_6, window_bounds = array<i64: 1, 8, 2>}]} {
    %c0_i32 = arith.constant 0 : i32
    %0 = arith.cmpi eq, %arg1, %c0_i32 : i32
    %1 = arith.extui %0 : i1 to i32
    %c0_i32_0 = arith.constant 0 : i32
    %2 = arith.cmpi ne, %1, %c0_i32_0 : i32
    scf.if %2 {
      %cst_19 = arith.constant 0.000000e+00 : f32
      %32 = vector.broadcast %cst_19 : f32 to vector<8x48xf32>
      %c0_20 = arith.constant 0 : index
      %c0_21 = arith.constant 0 : index
      %33 = vector.load %arg9[%c0_20, %c0_21] : memref<8x48xf32, #tpu.memory_space<vmem>>, vector<8x48xf32>
      tpu.vector_store %arg9[%c0_20, %c0_21], %32 {strides = array<i32>} : memref<8x48xf32, #tpu.memory_space<vmem>>, vector<8x48xf32>,
      %cst_22 = arith.constant 0.000000e+00 : f32
      %34 = vector.broadcast %cst_22 : f32 to vector<8x48xf32>
      %c0_23 = arith.constant 0 : index
      %c0_24 = arith.constant 0 : index
      %35 = vector.load %arg10[%c0_23, %c0_24] : memref<8x48xf32, #tpu.memory_space<vmem>>, vector<8x48xf32>
      tpu.vector_store %arg10[%c0_23, %c0_24], %34 {strides = array<i32>} : memref<8x48xf32, #tpu.memory_space<vmem>>, vector<8x48xf32>,
    } else {
    }
    %c0 = arith.constant 0 : index
    %c0_1 = arith.constant 0 : index
    %3 = vector.load %arg2[%c0, %c0_1] : memref<4x48xbf16, #tpu.memory_space<vmem>>, vector<4x48xbf16>
    %cst = arith.constant 0.000000e+00 : bf16
    %4 = vector.broadcast %cst : bf16 to vector<4x4xbf16>
    %5 = tpu.concatenate %4, %3, %4 in 1 : vector<4x4xbf16>, vector<4x48xbf16>, vector<4x4xbf16> -> vector<4x56xbf16>
    %6 = vector.extract_strided_slice %5 {offsets = [0, 1], sizes = [4, 48], strides = [1, 1]} : vector<4x56xbf16> to vector<4x48xbf16>
    %7 = vector.extract_strided_slice %5 {offsets = [0, 2], sizes = [4, 48], strides = [1, 1]} : vector<4x56xbf16> to vector<4x48xbf16>
    %8 = vector.extract_strided_slice %5 {offsets = [0, 3], sizes = [4, 48], strides = [1, 1]} : vector<4x56xbf16> to vector<4x48xbf16>
    %9 = vector.extract_strided_slice %5 {offsets = [0, 4], sizes = [4, 48], strides = [1, 1]} : vector<4x56xbf16> to vector<4x48xbf16>
    %10 = vector.extract_strided_slice %5 {offsets = [0, 5], sizes = [4, 48], strides = [1, 1]} : vector<4x56xbf16> to vector<4x48xbf16>
    %11 = vector.extract_strided_slice %5 {offsets = [0, 6], sizes = [4, 48], strides = [1, 1]} : vector<4x56xbf16> to vector<4x48xbf16>
    %12 = vector.extract_strided_slice %5 {offsets = [0, 7], sizes = [4, 48], strides = [1, 1]} : vector<4x56xbf16> to vector<4x48xbf16>
    %13 = vector.extract_strided_slice %5 {offsets = [0, 8], sizes = [4, 48], strides = [1, 1]} : vector<4x56xbf16> to vector<4x48xbf16>
    %14 = tpu.concatenate %6, %7, %8, %9, %10, %11, %12, %13 in 0 : vector<4x48xbf16>, vector<4x48xbf16>, vector<4x48xbf16>, vector<4x48xbf16>, vector<4x48xbf16>, vector<4x48xbf16>, vector<4x48xbf16>, vector<4x48xbf16> -> vector<32x48xbf16>
    %c0_2 = arith.constant 0 : index
    %c0_3 = arith.constant 0 : index
    %15 = vector.load %arg5[%c0_2, %c0_3] : memref<8x32xbf16, #tpu.memory_space<vmem>>, vector<8x32xbf16>
    %cst_4 = arith.constant dense<0.000000e+00> : vector<8x48xf32>
    %16 = tpu.matmul %15, %14, %cst_4 {dimension_numbers = #tpu.dot_dimension_numbers<[1], [0], [0], [1], [0, 0, 1, 1], [], []>} : vector<8x32xbf16>, vector<32x48xbf16>, vector<8x48xf32> -> vector<8x48xf32>
    %c0_5 = arith.constant 0 : index
    %c0_6 = arith.constant 0 : index
    %17 = vector.load %arg6[%c0_5, %c0_6] : memref<1x48xf32, #tpu.memory_space<vmem>>, vector<1x48xf32>
    %18 = vector.broadcast %17 : vector<1x48xf32> to vector<8x48xf32>
    %19 = arith.mulf %16, %18 : vector<8x48xf32>
    %c0_7 = arith.constant 0 : index
    %c0_8 = arith.constant 0 : index
    %20 = vector.load %arg9[%c0_7, %c0_8] : memref<8x48xf32, #tpu.memory_space<vmem>>, vector<8x48xf32>
    %21 = arith.addf %20, %19 : vector<8x48xf32>
    %c0_9 = arith.constant 0 : index
    %c0_10 = arith.constant 0 : index
    %22 = vector.load %arg9[%c0_9, %c0_10] : memref<8x48xf32, #tpu.memory_space<vmem>>, vector<8x48xf32>
    tpu.vector_store %arg9[%c0_9, %c0_10], %21 {strides = array<i32>} : memref<8x48xf32, #tpu.memory_space<vmem>>, vector<8x48xf32>,
    %c0_11 = arith.constant 0 : index
    %c0_12 = arith.constant 0 : index
    %23 = vector.load %arg10[%c0_11, %c0_12] : memref<8x48xf32, #tpu.memory_space<vmem>>, vector<8x48xf32>
    %24 = arith.mulf %19, %19 : vector<8x48xf32>
    %25 = arith.addf %23, %24 : vector<8x48xf32>
    %c0_13 = arith.constant 0 : index
    %c0_14 = arith.constant 0 : index
    %26 = vector.load %arg10[%c0_13, %c0_14] : memref<8x48xf32, #tpu.memory_space<vmem>>, vector<8x48xf32>
    tpu.vector_store %arg10[%c0_13, %c0_14], %25 {strides = array<i32>} : memref<8x48xf32, #tpu.memory_space<vmem>>, vector<8x48xf32>,
    %27 = arith.truncf %19 : vector<8x48xf32> to vector<8x48xbf16>
    %c0_15 = arith.constant 0 : index
    %c0_16 = arith.constant 0 : index
    %28 = vector.load %arg7[%c0_15, %c0_16] : memref<8x48xbf16, #tpu.memory_space<vmem>>, vector<8x48xbf16>
    tpu.vector_store %arg7[%c0_15, %c0_16], %27 {strides = array<i32>} : memref<8x48xbf16, #tpu.memory_space<vmem>>, vector<8x48xbf16>,
    %c0_i32_17 = arith.constant 0 : i32
    %29 = arith.cmpi eq, %arg1, %c0_i32_17 : i32
    %30 = arith.extui %29 : i1 to i32
    %c0_i32_18 = arith.constant 0 : i32
    %31 = arith.cmpi ne, %30, %c0_i32_18 : i32
    scf.if %31 {
      %c0_19 = arith.constant 0 : index
      %c0_20 = arith.constant 0 : index
      %32 = vector.load %arg9[%c0_19, %c0_20] : memref<8x48xf32, #tpu.memory_space<vmem>>, vector<8x48xf32>
      %cst_21 = arith.constant dense<0.000000e+00> : vector<8xf32>
      %33 = vector.multi_reduction <add>, %32, %cst_21 [1] : vector<8x48xf32> to vector<8xf32>
      %34 = vector.shape_cast %33 : vector<8xf32> to vector<8x1xf32>
      %c0_22 = arith.constant 0 : index
      %c0_23 = arith.constant 0 : index
      %35 = vector.load %arg10[%c0_22, %c0_23] : memref<8x48xf32, #tpu.memory_space<vmem>>, vector<8x48xf32>
      %cst_24 = arith.constant dense<0.000000e+00> : vector<8xf32>
      %36 = vector.multi_reduction <add>, %35, %cst_24 [1] : vector<8x48xf32> to vector<8xf32>
      %37 = vector.shape_cast %36 : vector<8xf32> to vector<8x1xf32>
      %38 = tpu.concatenate %34, %37 in 1 : vector<8x1xf32>, vector<8x1xf32> -> vector<8x2xf32>
      %c0_25 = arith.constant 0 : index
      %c0_26 = arith.constant 0 : index
      %c0_27 = arith.constant 0 : index
      %39 = vector.load %arg8[%c0_25, %c0_26, %c0_27] : memref<1x8x2xf32, #tpu.memory_space<vmem>>, vector<1x8x2xf32>
      %40 = vector.shape_cast %39 : vector<1x8x2xf32> to vector<8x2xf32>
      %41 = vector.shape_cast %38 : vector<8x2xf32> to vector<1x8x2xf32>
      tpu.vector_store %arg8[%c0_25, %c0_26, %c0_27], %41 {strides = array<i32>} : memref<1x8x2xf32, #tpu.memory_space<vmem>>, vector<1x8x2xf32>,
    } else {
    }
    return
  }
  func.func @transform_0(%arg0: i32, %arg1: i32) -> (i32, i32) {
    %c1_i32 = arith.constant 1 : i32
    %0 = arith.muli %arg0, %c1_i32 : i32
    %1 = arith.addi %0, %arg1 : i32
    %c0_i32 = arith.constant 0 : i32
    %c0_i32_0 = arith.constant 0 : i32
    return %c0_i32, %1 : i32, i32
  }
  func.func @transform_1(%arg0: i32, %arg1: i32) -> (i32, i32) {
    %c0_i32 = arith.constant 0 : i32
    %c0_i32_0 = arith.constant 0 : i32
    %c0_i32_1 = arith.constant 0 : i32
    return %c0_i32, %c0_i32_0 : i32, i32
  }
  func.func @transform_2(%arg0: i32, %arg1: i32) -> (i32, i32) {
    %c0_i32 = arith.constant 0 : i32
    %c0_i32_0 = arith.constant 0 : i32
    %c0_i32_1 = arith.constant 0 : i32
    return %c0_i32, %c0_i32_0 : i32, i32
  }
  func.func @transform_3(%arg0: i32, %arg1: i32) -> (i32, i32) {
    %c0_i32 = arith.constant 0 : i32
    %c0_i32_0 = arith.constant 0 : i32
    %c0_i32_1 = arith.constant 0 : i32
    return %c0_i32, %c0_i32_0 : i32, i32
  }
  func.func @transform_4(%arg0: i32, %arg1: i32) -> (i32, i32) {
    %c0_i32 = arith.constant 0 : i32
    %c0_i32_0 = arith.constant 0 : i32
    %c0_i32_1 = arith.constant 0 : i32
    return %c0_i32, %c0_i32_0 : i32, i32
  }
  func.func @transform_5(%arg0: i32, %arg1: i32) -> (i32, i32) {
    %c1_i32 = arith.constant 1 : i32
    %0 = arith.muli %arg0, %c1_i32 : i32
    %1 = arith.addi %0, %arg1 : i32
    %c0_i32 = arith.constant 0 : i32
    %c0_i32_0 = arith.constant 0 : i32
    return %c0_i32, %1 : i32, i32
  }
  func.func @transform_6(%arg0: i32, %arg1: i32) -> (i32, i32, i32) {
    %c0_i32 = arith.constant 0 : i32
    %c0_i32_0 = arith.constant 0 : i32
    %c0_i32_1 = arith.constant 0 : i32
    return %arg0, %c0_i32, %c0_i32_0 : i32, i32, i32
  }
}

module attributes {stable_mosaic.version = 11 : i64} {
  func.func @_conv_stats_kernel(%arg0: i32, %arg1: i32, %arg2: memref<8x48xbf16, #tpu.memory_space<vmem>>, %arg3: memref<8x1xf32, #tpu.memory_space<vmem>>, %arg4: memref<8x1xf32, #tpu.memory_space<vmem>>, %arg5: memref<8x40xbf16, #tpu.memory_space<vmem>>, %arg6: memref<1x48xf32, #tpu.memory_space<vmem>>, %arg7: memref<8x48xbf16, #tpu.memory_space<vmem>>, %arg8: memref<1x8x2xf32, #tpu.memory_space<vmem>>, %arg9: memref<8x48xf32, #tpu.memory_space<vmem>>, %arg10: memref<8x48xf32, #tpu.memory_space<vmem>>) attributes {dimension_semantics = [#tpu.dimension_semantics<parallel>, #tpu.dimension_semantics<arbitrary>], iteration_bounds = array<i64: 1, 1>, scalar_prefetch = 0 : i64, scratch_operands = 2 : i64, tpu.core_type = #tpu.core_type<tc>, window_params = [{transform_indices = @transform_0, window_bounds = array<i64: 8, 48>}, {pipeline_mode = #tpu.pipeline_mode<synchronous>, transform_indices = @transform_1, window_bounds = array<i64: 8, 1>}, {pipeline_mode = #tpu.pipeline_mode<synchronous>, transform_indices = @transform_2, window_bounds = array<i64: 8, 1>}, {pipeline_mode = #tpu.pipeline_mode<synchronous>, transform_indices = @transform_3, window_bounds = array<i64: 8, 40>}, {pipeline_mode = #tpu.pipeline_mode<synchronous>, transform_indices = @transform_4, window_bounds = array<i64: 1, 48>}, {transform_indices = @transform_5, window_bounds = array<i64: 8, 48>}, {transform_indices = @transform_6, window_bounds = array<i64: 1, 8, 2>}]} {
    %c0_i32 = arith.constant 0 : i32
    %0 = arith.cmpi eq, %arg1, %c0_i32 : i32
    %1 = arith.extui %0 : i1 to i32
    %c0_i32_0 = arith.constant 0 : i32
    %2 = arith.cmpi ne, %1, %c0_i32_0 : i32
    scf.if %2 {
      %cst_26 = arith.constant 0.000000e+00 : f32
      %42 = vector.broadcast %cst_26 : f32 to vector<8x48xf32>
      %c0_27 = arith.constant 0 : index
      %c0_28 = arith.constant 0 : index
      %43 = vector.load %arg9[%c0_27, %c0_28] : memref<8x48xf32, #tpu.memory_space<vmem>>, vector<8x48xf32>
      tpu.vector_store %arg9[%c0_27, %c0_28], %42 {strides = array<i32>} : memref<8x48xf32, #tpu.memory_space<vmem>>, vector<8x48xf32>,
      %cst_29 = arith.constant 0.000000e+00 : f32
      %44 = vector.broadcast %cst_29 : f32 to vector<8x48xf32>
      %c0_30 = arith.constant 0 : index
      %c0_31 = arith.constant 0 : index
      %45 = vector.load %arg10[%c0_30, %c0_31] : memref<8x48xf32, #tpu.memory_space<vmem>>, vector<8x48xf32>
      tpu.vector_store %arg10[%c0_30, %c0_31], %44 {strides = array<i32>} : memref<8x48xf32, #tpu.memory_space<vmem>>, vector<8x48xf32>,
    } else {
    }
    %c0 = arith.constant 0 : index
    %c0_1 = arith.constant 0 : index
    %3 = vector.load %arg2[%c0, %c0_1] : memref<8x48xbf16, #tpu.memory_space<vmem>>, vector<8x48xbf16>
    %4 = arith.extf %3 : vector<8x48xbf16> to vector<8x48xf32>
    %c0_2 = arith.constant 0 : index
    %c0_3 = arith.constant 0 : index
    %5 = vector.load %arg3[%c0_2, %c0_3] : memref<8x1xf32, #tpu.memory_space<vmem>>, vector<8x1xf32>
    %6 = vector.broadcast %5 : vector<8x1xf32> to vector<8x48xf32>
    %7 = arith.mulf %4, %6 : vector<8x48xf32>
    %c0_4 = arith.constant 0 : index
    %c0_5 = arith.constant 0 : index
    %8 = vector.load %arg4[%c0_4, %c0_5] : memref<8x1xf32, #tpu.memory_space<vmem>>, vector<8x1xf32>
    %9 = vector.broadcast %8 : vector<8x1xf32> to vector<8x48xf32>
    %10 = arith.addf %7, %9 : vector<8x48xf32>
    %cst = arith.constant 0.000000e+00 : f32
    %11 = vector.broadcast %cst : f32 to vector<8x48xf32>
    %12 = arith.maximumf %10, %11 : vector<8x48xf32>
    %c0_6 = arith.constant 0 : index
    %c0_7 = arith.constant 0 : index
    %13 = vector.load %arg6[%c0_6, %c0_7] : memref<1x48xf32, #tpu.memory_space<vmem>>, vector<1x48xf32>
    %14 = vector.broadcast %13 : vector<1x48xf32> to vector<8x48xf32>
    %15 = arith.mulf %12, %14 : vector<8x48xf32>
    %16 = arith.truncf %15 : vector<8x48xf32> to vector<8x48xbf16>
    %cst_8 = arith.constant 0.000000e+00 : bf16
    %17 = vector.broadcast %cst_8 : bf16 to vector<8x4xbf16>
    %18 = tpu.concatenate %17, %16, %17 in 1 : vector<8x4xbf16>, vector<8x48xbf16>, vector<8x4xbf16> -> vector<8x56xbf16>
    %19 = vector.extract_strided_slice %18 {offsets = [0, 2], sizes = [8, 48], strides = [1, 1]} : vector<8x56xbf16> to vector<8x48xbf16>
    %20 = vector.extract_strided_slice %18 {offsets = [0, 3], sizes = [8, 48], strides = [1, 1]} : vector<8x56xbf16> to vector<8x48xbf16>
    %21 = vector.extract_strided_slice %18 {offsets = [0, 4], sizes = [8, 48], strides = [1, 1]} : vector<8x56xbf16> to vector<8x48xbf16>
    %22 = vector.extract_strided_slice %18 {offsets = [0, 5], sizes = [8, 48], strides = [1, 1]} : vector<8x56xbf16> to vector<8x48xbf16>
    %23 = vector.extract_strided_slice %18 {offsets = [0, 6], sizes = [8, 48], strides = [1, 1]} : vector<8x56xbf16> to vector<8x48xbf16>
    %24 = tpu.concatenate %19, %20, %21, %22, %23 in 0 : vector<8x48xbf16>, vector<8x48xbf16>, vector<8x48xbf16>, vector<8x48xbf16>, vector<8x48xbf16> -> vector<40x48xbf16>
    %c0_9 = arith.constant 0 : index
    %c0_10 = arith.constant 0 : index
    %25 = vector.load %arg5[%c0_9, %c0_10] : memref<8x40xbf16, #tpu.memory_space<vmem>>, vector<8x40xbf16>
    %cst_11 = arith.constant dense<0.000000e+00> : vector<8x48xf32>
    %26 = tpu.matmul %25, %24, %cst_11 {dimension_numbers = #tpu.dot_dimension_numbers<[1], [0], [0], [1], [0, 0, 1, 1], [], []>} : vector<8x40xbf16>, vector<40x48xbf16>, vector<8x48xf32> -> vector<8x48xf32>
    %c0_12 = arith.constant 0 : index
    %c0_13 = arith.constant 0 : index
    %27 = vector.load %arg6[%c0_12, %c0_13] : memref<1x48xf32, #tpu.memory_space<vmem>>, vector<1x48xf32>
    %28 = vector.broadcast %27 : vector<1x48xf32> to vector<8x48xf32>
    %29 = arith.mulf %26, %28 : vector<8x48xf32>
    %c0_14 = arith.constant 0 : index
    %c0_15 = arith.constant 0 : index
    %30 = vector.load %arg9[%c0_14, %c0_15] : memref<8x48xf32, #tpu.memory_space<vmem>>, vector<8x48xf32>
    %31 = arith.addf %30, %29 : vector<8x48xf32>
    %c0_16 = arith.constant 0 : index
    %c0_17 = arith.constant 0 : index
    %32 = vector.load %arg9[%c0_16, %c0_17] : memref<8x48xf32, #tpu.memory_space<vmem>>, vector<8x48xf32>
    tpu.vector_store %arg9[%c0_16, %c0_17], %31 {strides = array<i32>} : memref<8x48xf32, #tpu.memory_space<vmem>>, vector<8x48xf32>,
    %c0_18 = arith.constant 0 : index
    %c0_19 = arith.constant 0 : index
    %33 = vector.load %arg10[%c0_18, %c0_19] : memref<8x48xf32, #tpu.memory_space<vmem>>, vector<8x48xf32>
    %34 = arith.mulf %29, %29 : vector<8x48xf32>
    %35 = arith.addf %33, %34 : vector<8x48xf32>
    %c0_20 = arith.constant 0 : index
    %c0_21 = arith.constant 0 : index
    %36 = vector.load %arg10[%c0_20, %c0_21] : memref<8x48xf32, #tpu.memory_space<vmem>>, vector<8x48xf32>
    tpu.vector_store %arg10[%c0_20, %c0_21], %35 {strides = array<i32>} : memref<8x48xf32, #tpu.memory_space<vmem>>, vector<8x48xf32>,
    %37 = arith.truncf %29 : vector<8x48xf32> to vector<8x48xbf16>
    %c0_22 = arith.constant 0 : index
    %c0_23 = arith.constant 0 : index
    %38 = vector.load %arg7[%c0_22, %c0_23] : memref<8x48xbf16, #tpu.memory_space<vmem>>, vector<8x48xbf16>
    tpu.vector_store %arg7[%c0_22, %c0_23], %37 {strides = array<i32>} : memref<8x48xbf16, #tpu.memory_space<vmem>>, vector<8x48xbf16>,
    %c0_i32_24 = arith.constant 0 : i32
    %39 = arith.cmpi eq, %arg1, %c0_i32_24 : i32
    %40 = arith.extui %39 : i1 to i32
    %c0_i32_25 = arith.constant 0 : i32
    %41 = arith.cmpi ne, %40, %c0_i32_25 : i32
    scf.if %41 {
      %c0_26 = arith.constant 0 : index
      %c0_27 = arith.constant 0 : index
      %42 = vector.load %arg9[%c0_26, %c0_27] : memref<8x48xf32, #tpu.memory_space<vmem>>, vector<8x48xf32>
      %cst_28 = arith.constant dense<0.000000e+00> : vector<8xf32>
      %43 = vector.multi_reduction <add>, %42, %cst_28 [1] : vector<8x48xf32> to vector<8xf32>
      %44 = vector.shape_cast %43 : vector<8xf32> to vector<8x1xf32>
      %c0_29 = arith.constant 0 : index
      %c0_30 = arith.constant 0 : index
      %45 = vector.load %arg10[%c0_29, %c0_30] : memref<8x48xf32, #tpu.memory_space<vmem>>, vector<8x48xf32>
      %cst_31 = arith.constant dense<0.000000e+00> : vector<8xf32>
      %46 = vector.multi_reduction <add>, %45, %cst_31 [1] : vector<8x48xf32> to vector<8xf32>
      %47 = vector.shape_cast %46 : vector<8xf32> to vector<8x1xf32>
      %48 = tpu.concatenate %44, %47 in 1 : vector<8x1xf32>, vector<8x1xf32> -> vector<8x2xf32>
      %c0_32 = arith.constant 0 : index
      %c0_33 = arith.constant 0 : index
      %c0_34 = arith.constant 0 : index
      %49 = vector.load %arg8[%c0_32, %c0_33, %c0_34] : memref<1x8x2xf32, #tpu.memory_space<vmem>>, vector<1x8x2xf32>
      %50 = vector.shape_cast %49 : vector<1x8x2xf32> to vector<8x2xf32>
      %51 = vector.shape_cast %48 : vector<8x2xf32> to vector<1x8x2xf32>
      tpu.vector_store %arg8[%c0_32, %c0_33, %c0_34], %51 {strides = array<i32>} : memref<1x8x2xf32, #tpu.memory_space<vmem>>, vector<1x8x2xf32>,
    } else {
    }
    return
  }
  func.func @transform_0(%arg0: i32, %arg1: i32) -> (i32, i32) {
    %c1_i32 = arith.constant 1 : i32
    %0 = arith.muli %arg0, %c1_i32 : i32
    %1 = arith.addi %0, %arg1 : i32
    %c0_i32 = arith.constant 0 : i32
    %c0_i32_0 = arith.constant 0 : i32
    return %c0_i32, %1 : i32, i32
  }
  func.func @transform_1(%arg0: i32, %arg1: i32) -> (i32, i32) {
    %c0_i32 = arith.constant 0 : i32
    %c0_i32_0 = arith.constant 0 : i32
    %c0_i32_1 = arith.constant 0 : i32
    return %c0_i32, %c0_i32_0 : i32, i32
  }
  func.func @transform_2(%arg0: i32, %arg1: i32) -> (i32, i32) {
    %c0_i32 = arith.constant 0 : i32
    %c0_i32_0 = arith.constant 0 : i32
    %c0_i32_1 = arith.constant 0 : i32
    return %c0_i32, %c0_i32_0 : i32, i32
  }
  func.func @transform_3(%arg0: i32, %arg1: i32) -> (i32, i32) {
    %c0_i32 = arith.constant 0 : i32
    %c0_i32_0 = arith.constant 0 : i32
    %c0_i32_1 = arith.constant 0 : i32
    return %c0_i32, %c0_i32_0 : i32, i32
  }
  func.func @transform_4(%arg0: i32, %arg1: i32) -> (i32, i32) {
    %c0_i32 = arith.constant 0 : i32
    %c0_i32_0 = arith.constant 0 : i32
    %c0_i32_1 = arith.constant 0 : i32
    return %c0_i32, %c0_i32_0 : i32, i32
  }
  func.func @transform_5(%arg0: i32, %arg1: i32) -> (i32, i32) {
    %c1_i32 = arith.constant 1 : i32
    %0 = arith.muli %arg0, %c1_i32 : i32
    %1 = arith.addi %0, %arg1 : i32
    %c0_i32 = arith.constant 0 : i32
    %c0_i32_0 = arith.constant 0 : i32
    return %c0_i32, %1 : i32, i32
  }
  func.func @transform_6(%arg0: i32, %arg1: i32) -> (i32, i32, i32) {
    %c0_i32 = arith.constant 0 : i32
    %c0_i32_0 = arith.constant 0 : i32
    %c0_i32_1 = arith.constant 0 : i32
    return %arg0, %c0_i32, %c0_i32_0 : i32, i32, i32
  }
}

module attributes {stable_mosaic.version = 11 : i64} {
  func.func @_conv_stats_kernel(%arg0: i32, %arg1: i32, %arg2: memref<8x48xbf16, #tpu.memory_space<vmem>>, %arg3: memref<8x1xf32, #tpu.memory_space<vmem>>, %arg4: memref<8x1xf32, #tpu.memory_space<vmem>>, %arg5: memref<8x24xbf16, #tpu.memory_space<vmem>>, %arg6: memref<1x48xf32, #tpu.memory_space<vmem>>, %arg7: memref<8x48xbf16, #tpu.memory_space<vmem>>, %arg8: memref<1x8x2xf32, #tpu.memory_space<vmem>>, %arg9: memref<8x48xf32, #tpu.memory_space<vmem>>, %arg10: memref<8x48xf32, #tpu.memory_space<vmem>>) attributes {dimension_semantics = [#tpu.dimension_semantics<parallel>, #tpu.dimension_semantics<arbitrary>], iteration_bounds = array<i64: 1, 1>, scalar_prefetch = 0 : i64, scratch_operands = 2 : i64, tpu.core_type = #tpu.core_type<tc>, window_params = [{transform_indices = @transform_0, window_bounds = array<i64: 8, 48>}, {pipeline_mode = #tpu.pipeline_mode<synchronous>, transform_indices = @transform_1, window_bounds = array<i64: 8, 1>}, {pipeline_mode = #tpu.pipeline_mode<synchronous>, transform_indices = @transform_2, window_bounds = array<i64: 8, 1>}, {pipeline_mode = #tpu.pipeline_mode<synchronous>, transform_indices = @transform_3, window_bounds = array<i64: 8, 24>}, {pipeline_mode = #tpu.pipeline_mode<synchronous>, transform_indices = @transform_4, window_bounds = array<i64: 1, 48>}, {transform_indices = @transform_5, window_bounds = array<i64: 8, 48>}, {transform_indices = @transform_6, window_bounds = array<i64: 1, 8, 2>}]} {
    %c0_i32 = arith.constant 0 : i32
    %0 = arith.cmpi eq, %arg1, %c0_i32 : i32
    %1 = arith.extui %0 : i1 to i32
    %c0_i32_0 = arith.constant 0 : i32
    %2 = arith.cmpi ne, %1, %c0_i32_0 : i32
    scf.if %2 {
      %cst_26 = arith.constant 0.000000e+00 : f32
      %40 = vector.broadcast %cst_26 : f32 to vector<8x48xf32>
      %c0_27 = arith.constant 0 : index
      %c0_28 = arith.constant 0 : index
      %41 = vector.load %arg9[%c0_27, %c0_28] : memref<8x48xf32, #tpu.memory_space<vmem>>, vector<8x48xf32>
      tpu.vector_store %arg9[%c0_27, %c0_28], %40 {strides = array<i32>} : memref<8x48xf32, #tpu.memory_space<vmem>>, vector<8x48xf32>,
      %cst_29 = arith.constant 0.000000e+00 : f32
      %42 = vector.broadcast %cst_29 : f32 to vector<8x48xf32>
      %c0_30 = arith.constant 0 : index
      %c0_31 = arith.constant 0 : index
      %43 = vector.load %arg10[%c0_30, %c0_31] : memref<8x48xf32, #tpu.memory_space<vmem>>, vector<8x48xf32>
      tpu.vector_store %arg10[%c0_30, %c0_31], %42 {strides = array<i32>} : memref<8x48xf32, #tpu.memory_space<vmem>>, vector<8x48xf32>,
    } else {
    }
    %c0 = arith.constant 0 : index
    %c0_1 = arith.constant 0 : index
    %3 = vector.load %arg2[%c0, %c0_1] : memref<8x48xbf16, #tpu.memory_space<vmem>>, vector<8x48xbf16>
    %4 = arith.extf %3 : vector<8x48xbf16> to vector<8x48xf32>
    %c0_2 = arith.constant 0 : index
    %c0_3 = arith.constant 0 : index
    %5 = vector.load %arg3[%c0_2, %c0_3] : memref<8x1xf32, #tpu.memory_space<vmem>>, vector<8x1xf32>
    %6 = vector.broadcast %5 : vector<8x1xf32> to vector<8x48xf32>
    %7 = arith.mulf %4, %6 : vector<8x48xf32>
    %c0_4 = arith.constant 0 : index
    %c0_5 = arith.constant 0 : index
    %8 = vector.load %arg4[%c0_4, %c0_5] : memref<8x1xf32, #tpu.memory_space<vmem>>, vector<8x1xf32>
    %9 = vector.broadcast %8 : vector<8x1xf32> to vector<8x48xf32>
    %10 = arith.addf %7, %9 : vector<8x48xf32>
    %cst = arith.constant 0.000000e+00 : f32
    %11 = vector.broadcast %cst : f32 to vector<8x48xf32>
    %12 = arith.maximumf %10, %11 : vector<8x48xf32>
    %c0_6 = arith.constant 0 : index
    %c0_7 = arith.constant 0 : index
    %13 = vector.load %arg6[%c0_6, %c0_7] : memref<1x48xf32, #tpu.memory_space<vmem>>, vector<1x48xf32>
    %14 = vector.broadcast %13 : vector<1x48xf32> to vector<8x48xf32>
    %15 = arith.mulf %12, %14 : vector<8x48xf32>
    %16 = arith.truncf %15 : vector<8x48xf32> to vector<8x48xbf16>
    %cst_8 = arith.constant 0.000000e+00 : bf16
    %17 = vector.broadcast %cst_8 : bf16 to vector<8x4xbf16>
    %18 = tpu.concatenate %17, %16, %17 in 1 : vector<8x4xbf16>, vector<8x48xbf16>, vector<8x4xbf16> -> vector<8x56xbf16>
    %19 = vector.extract_strided_slice %18 {offsets = [0, 3], sizes = [8, 48], strides = [1, 1]} : vector<8x56xbf16> to vector<8x48xbf16>
    %20 = vector.extract_strided_slice %18 {offsets = [0, 4], sizes = [8, 48], strides = [1, 1]} : vector<8x56xbf16> to vector<8x48xbf16>
    %21 = vector.extract_strided_slice %18 {offsets = [0, 5], sizes = [8, 48], strides = [1, 1]} : vector<8x56xbf16> to vector<8x48xbf16>
    %22 = tpu.concatenate %19, %20, %21 in 0 : vector<8x48xbf16>, vector<8x48xbf16>, vector<8x48xbf16> -> vector<24x48xbf16>
    %c0_9 = arith.constant 0 : index
    %c0_10 = arith.constant 0 : index
    %23 = vector.load %arg5[%c0_9, %c0_10] : memref<8x24xbf16, #tpu.memory_space<vmem>>, vector<8x24xbf16>
    %cst_11 = arith.constant dense<0.000000e+00> : vector<8x48xf32>
    %24 = tpu.matmul %23, %22, %cst_11 {dimension_numbers = #tpu.dot_dimension_numbers<[1], [0], [0], [1], [0, 0, 1, 1], [], []>} : vector<8x24xbf16>, vector<24x48xbf16>, vector<8x48xf32> -> vector<8x48xf32>
    %c0_12 = arith.constant 0 : index
    %c0_13 = arith.constant 0 : index
    %25 = vector.load %arg6[%c0_12, %c0_13] : memref<1x48xf32, #tpu.memory_space<vmem>>, vector<1x48xf32>
    %26 = vector.broadcast %25 : vector<1x48xf32> to vector<8x48xf32>
    %27 = arith.mulf %24, %26 : vector<8x48xf32>
    %c0_14 = arith.constant 0 : index
    %c0_15 = arith.constant 0 : index
    %28 = vector.load %arg9[%c0_14, %c0_15] : memref<8x48xf32, #tpu.memory_space<vmem>>, vector<8x48xf32>
    %29 = arith.addf %28, %27 : vector<8x48xf32>
    %c0_16 = arith.constant 0 : index
    %c0_17 = arith.constant 0 : index
    %30 = vector.load %arg9[%c0_16, %c0_17] : memref<8x48xf32, #tpu.memory_space<vmem>>, vector<8x48xf32>
    tpu.vector_store %arg9[%c0_16, %c0_17], %29 {strides = array<i32>} : memref<8x48xf32, #tpu.memory_space<vmem>>, vector<8x48xf32>,
    %c0_18 = arith.constant 0 : index
    %c0_19 = arith.constant 0 : index
    %31 = vector.load %arg10[%c0_18, %c0_19] : memref<8x48xf32, #tpu.memory_space<vmem>>, vector<8x48xf32>
    %32 = arith.mulf %27, %27 : vector<8x48xf32>
    %33 = arith.addf %31, %32 : vector<8x48xf32>
    %c0_20 = arith.constant 0 : index
    %c0_21 = arith.constant 0 : index
    %34 = vector.load %arg10[%c0_20, %c0_21] : memref<8x48xf32, #tpu.memory_space<vmem>>, vector<8x48xf32>
    tpu.vector_store %arg10[%c0_20, %c0_21], %33 {strides = array<i32>} : memref<8x48xf32, #tpu.memory_space<vmem>>, vector<8x48xf32>,
    %35 = arith.truncf %27 : vector<8x48xf32> to vector<8x48xbf16>
    %c0_22 = arith.constant 0 : index
    %c0_23 = arith.constant 0 : index
    %36 = vector.load %arg7[%c0_22, %c0_23] : memref<8x48xbf16, #tpu.memory_space<vmem>>, vector<8x48xbf16>
    tpu.vector_store %arg7[%c0_22, %c0_23], %35 {strides = array<i32>} : memref<8x48xbf16, #tpu.memory_space<vmem>>, vector<8x48xbf16>,
    %c0_i32_24 = arith.constant 0 : i32
    %37 = arith.cmpi eq, %arg1, %c0_i32_24 : i32
    %38 = arith.extui %37 : i1 to i32
    %c0_i32_25 = arith.constant 0 : i32
    %39 = arith.cmpi ne, %38, %c0_i32_25 : i32
    scf.if %39 {
      %c0_26 = arith.constant 0 : index
      %c0_27 = arith.constant 0 : index
      %40 = vector.load %arg9[%c0_26, %c0_27] : memref<8x48xf32, #tpu.memory_space<vmem>>, vector<8x48xf32>
      %cst_28 = arith.constant dense<0.000000e+00> : vector<8xf32>
      %41 = vector.multi_reduction <add>, %40, %cst_28 [1] : vector<8x48xf32> to vector<8xf32>
      %42 = vector.shape_cast %41 : vector<8xf32> to vector<8x1xf32>
      %c0_29 = arith.constant 0 : index
      %c0_30 = arith.constant 0 : index
      %43 = vector.load %arg10[%c0_29, %c0_30] : memref<8x48xf32, #tpu.memory_space<vmem>>, vector<8x48xf32>
      %cst_31 = arith.constant dense<0.000000e+00> : vector<8xf32>
      %44 = vector.multi_reduction <add>, %43, %cst_31 [1] : vector<8x48xf32> to vector<8xf32>
      %45 = vector.shape_cast %44 : vector<8xf32> to vector<8x1xf32>
      %46 = tpu.concatenate %42, %45 in 1 : vector<8x1xf32>, vector<8x1xf32> -> vector<8x2xf32>
      %c0_32 = arith.constant 0 : index
      %c0_33 = arith.constant 0 : index
      %c0_34 = arith.constant 0 : index
      %47 = vector.load %arg8[%c0_32, %c0_33, %c0_34] : memref<1x8x2xf32, #tpu.memory_space<vmem>>, vector<1x8x2xf32>
      %48 = vector.shape_cast %47 : vector<1x8x2xf32> to vector<8x2xf32>
      %49 = vector.shape_cast %46 : vector<8x2xf32> to vector<1x8x2xf32>
      tpu.vector_store %arg8[%c0_32, %c0_33, %c0_34], %49 {strides = array<i32>} : memref<1x8x2xf32, #tpu.memory_space<vmem>>, vector<1x8x2xf32>,
    } else {
    }
    return
  }
  func.func @transform_0(%arg0: i32, %arg1: i32) -> (i32, i32) {
    %c1_i32 = arith.constant 1 : i32
    %0 = arith.muli %arg0, %c1_i32 : i32
    %1 = arith.addi %0, %arg1 : i32
    %c0_i32 = arith.constant 0 : i32
    %c0_i32_0 = arith.constant 0 : i32
    return %c0_i32, %1 : i32, i32
  }
  func.func @transform_1(%arg0: i32, %arg1: i32) -> (i32, i32) {
    %c0_i32 = arith.constant 0 : i32
    %c0_i32_0 = arith.constant 0 : i32
    %c0_i32_1 = arith.constant 0 : i32
    return %c0_i32, %c0_i32_0 : i32, i32
  }
  func.func @transform_2(%arg0: i32, %arg1: i32) -> (i32, i32) {
    %c0_i32 = arith.constant 0 : i32
    %c0_i32_0 = arith.constant 0 : i32
    %c0_i32_1 = arith.constant 0 : i32
    return %c0_i32, %c0_i32_0 : i32, i32
  }
  func.func @transform_3(%arg0: i32, %arg1: i32) -> (i32, i32) {
    %c0_i32 = arith.constant 0 : i32
    %c0_i32_0 = arith.constant 0 : i32
    %c0_i32_1 = arith.constant 0 : i32
    return %c0_i32, %c0_i32_0 : i32, i32
  }
  func.func @transform_4(%arg0: i32, %arg1: i32) -> (i32, i32) {
    %c0_i32 = arith.constant 0 : i32
    %c0_i32_0 = arith.constant 0 : i32
    %c0_i32_1 = arith.constant 0 : i32
    return %c0_i32, %c0_i32_0 : i32, i32
  }
  func.func @transform_5(%arg0: i32, %arg1: i32) -> (i32, i32) {
    %c1_i32 = arith.constant 1 : i32
    %0 = arith.muli %arg0, %c1_i32 : i32
    %1 = arith.addi %0, %arg1 : i32
    %c0_i32 = arith.constant 0 : i32
    %c0_i32_0 = arith.constant 0 : i32
    return %c0_i32, %1 : i32, i32
  }
  func.func @transform_6(%arg0: i32, %arg1: i32) -> (i32, i32, i32) {
    %c0_i32 = arith.constant 0 : i32
    %c0_i32_0 = arith.constant 0 : i32
    %c0_i32_1 = arith.constant 0 : i32
    return %arg0, %c0_i32, %c0_i32_0 : i32, i32, i32
  }
}

module attributes {stable_mosaic.version = 11 : i64} {
  func.func @_final_kernel(%arg0: i32, %arg1: memref<8x48xbf16, #tpu.memory_space<vmem>>, %arg2: memref<8x1xf32, #tpu.memory_space<vmem>>, %arg3: memref<8x1xf32, #tpu.memory_space<vmem>>, %arg4: memref<4x48xbf16, #tpu.memory_space<vmem>>, %arg5: memref<8x4xbf16, #tpu.memory_space<vmem>>, %arg6: memref<8x48xf32, #tpu.memory_space<vmem>>) attributes {dimension_semantics = [#tpu.dimension_semantics<parallel>], iteration_bounds = array<i64: 1>, scalar_prefetch = 0 : i64, scratch_operands = 0 : i64, tpu.core_type = #tpu.core_type<tc>, window_params = [{transform_indices = @transform_0, window_bounds = array<i64: 8, 48>}, {pipeline_mode = #tpu.pipeline_mode<synchronous>, transform_indices = @transform_1, window_bounds = array<i64: 8, 1>}, {pipeline_mode = #tpu.pipeline_mode<synchronous>, transform_indices = @transform_2, window_bounds = array<i64: 8, 1>}, {transform_indices = @transform_3, window_bounds = array<i64: 4, 48>}, {pipeline_mode = #tpu.pipeline_mode<synchronous>, transform_indices = @transform_4, window_bounds = array<i64: 8, 4>}, {transform_indices = @transform_5, window_bounds = array<i64: 8, 48>}]} {
    %c0 = arith.constant 0 : index
    %c0_0 = arith.constant 0 : index
    %0 = vector.load %arg1[%c0, %c0_0] : memref<8x48xbf16, #tpu.memory_space<vmem>>, vector<8x48xbf16>
    %1 = arith.extf %0 : vector<8x48xbf16> to vector<8x48xf32>
    %c0_1 = arith.constant 0 : index
    %c0_2 = arith.constant 0 : index
    %2 = vector.load %arg2[%c0_1, %c0_2] : memref<8x1xf32, #tpu.memory_space<vmem>>, vector<8x1xf32>
    %3 = vector.broadcast %2 : vector<8x1xf32> to vector<8x48xf32>
    %4 = arith.mulf %1, %3 : vector<8x48xf32>
    %c0_3 = arith.constant 0 : index
    %c0_4 = arith.constant 0 : index
    %5 = vector.load %arg3[%c0_3, %c0_4] : memref<8x1xf32, #tpu.memory_space<vmem>>, vector<8x1xf32>
    %6 = vector.broadcast %5 : vector<8x1xf32> to vector<8x48xf32>
    %7 = arith.addf %4, %6 : vector<8x48xf32>
    %cst = arith.constant 0.000000e+00 : f32
    %8 = vector.broadcast %cst : f32 to vector<8x48xf32>
    %9 = arith.maximumf %7, %8 : vector<8x48xf32>
    %c0_5 = arith.constant 0 : index
    %c0_6 = arith.constant 0 : index
    %10 = vector.load %arg5[%c0_5, %c0_6] : memref<8x4xbf16, #tpu.memory_space<vmem>>, vector<8x4xbf16>
    %c0_7 = arith.constant 0 : index
    %c0_8 = arith.constant 0 : index
    %11 = vector.load %arg4[%c0_7, %c0_8] : memref<4x48xbf16, #tpu.memory_space<vmem>>, vector<4x48xbf16>
    %cst_9 = arith.constant dense<0.000000e+00> : vector<8x48xf32>
    %12 = tpu.matmul %10, %11, %cst_9 {dimension_numbers = #tpu.dot_dimension_numbers<[1], [0], [0], [1], [0, 0, 1, 1], [], []>} : vector<8x4xbf16>, vector<4x48xbf16>, vector<8x48xf32> -> vector<8x48xf32>
    %13 = arith.addf %9, %12 : vector<8x48xf32>
    %c0_10 = arith.constant 0 : index
    %c0_11 = arith.constant 0 : index
    %14 = vector.load %arg6[%c0_10, %c0_11] : memref<8x48xf32, #tpu.memory_space<vmem>>, vector<8x48xf32>
    tpu.vector_store %arg6[%c0_10, %c0_11], %13 {strides = array<i32>} : memref<8x48xf32, #tpu.memory_space<vmem>>, vector<8x48xf32>,
    return
  }
  func.func @transform_0(%arg0: i32) -> (i32, i32) {
    %c0_i32 = arith.constant 0 : i32
    %c0_i32_0 = arith.constant 0 : i32
    return %c0_i32, %arg0 : i32, i32
  }
  func.func @transform_1(%arg0: i32) -> (i32, i32) {
    %c0_i32 = arith.constant 0 : i32
    %c0_i32_0 = arith.constant 0 : i32
    %c0_i32_1 = arith.constant 0 : i32
    return %c0_i32, %c0_i32_0 : i32, i32
  }
  func.func @transform_2(%arg0: i32) -> (i32, i32) {
    %c0_i32 = arith.constant 0 : i32
    %c0_i32_0 = arith.constant 0 : i32
    %c0_i32_1 = arith.constant 0 : i32
    return %c0_i32, %c0_i32_0 : i32, i32
  }
  func.func @transform_3(%arg0: i32) -> (i32, i32) {
    %c0_i32 = arith.constant 0 : i32
    %c0_i32_0 = arith.constant 0 : i32
    return %c0_i32, %arg0 : i32, i32
  }
  func.func @transform_4(%arg0: i32) -> (i32, i32) {
    %c0_i32 = arith.constant 0 : i32
    %c0_i32_0 = arith.constant 0 : i32
    %c0_i32_1 = arith.constant 0 : i32
    return %c0_i32, %c0_i32_0 : i32, i32
  }
  func.func @transform_5(%arg0: i32) -> (i32, i32) {
    %c0_i32 = arith.constant 0 : i32
    %c0_i32_0 = arith.constant 0 : i32
    return %c0_i32, %arg0 : i32, i32
  }
}

</mosaic_0001>

<llo_original>
// kernel: tile.8
$region0: #{tile.8}
  #allocation0 [shape = 's32[1]{0}', space=sflag, size = 0x4, scoped, tag = 'scoped memory for tile.8']
  %s0 = inlined_call_operand.vmem [shape: f32[24], index: 0, kind: input, shape index: {}]
  %s1 = inlined_call_operand.vmem [shape: f32[2,24], index: 1, kind: output, shape index: {}]
  // Predicated region
  $region2: #{tile.8} parent=0 // pred_check
    _
  $region3: #{tile.8} parent=0 // pred_check_branch
    %3 = sbr.rel (0) target = $region5
  $region4: #{tile.8} parent=0 // pred_region
    _
  $region5: #{tile.8} parent=0 // pred_fallthru
    _
  %v4 = vld [vmem:[%s0] ss:$0 sm:$0xff]
  %5 = vst [vmem:[%s1] sm:$0x3] %v4

// kernel: tile.9
$region0: #{tile.9}
  %s0 = inlined_call_operand.vmem [shape: f32[2,24], index: 0, kind: input, shape index: {}]
  %s1 = inlined_call_operand.vmem [shape: f32[1,48], index: 1, kind: output, shape index: {}]
  $region1: #{tile.9} parent=0
    #allocation0 [shape = 'u8[4096]{0}', space=vmem, size = 0x1000, scoped, tag = 'scoped mem for output reshape']
    #allocation1 [shape = 'u8[4096]{0}', space=vmem, size = 0x1000, scoped, tag = 'scoped mem for input reshape']
    %s3 = sshllo.u32 0, 2
    %v4 = vld [vmem:[%s0] sm:%s3]
    %5 = vst [vmem:[#allocation1] sm:%s3] %v4
    %v6 = vld [vmem:[#allocation1] sm:$0x1]
    %vm7 = vcmask 195584
    %8 = vst.msk [vmem:[#allocation0] sm:$0x1] %vm7, %v6
    %s9 = scalar_lea.vmem [#allocation1], 1
    %v10 = vld [vmem:[%s9] sm:$0x1]
    %11 = vrot.lane.b32.xlu0 %v10, 24
    %v12 = vpop.permute.xlu0 %11
    %vm13 = vcmask 392384
    %14 = vst.msk [vmem:[#allocation0] sm:$0x1] %vm13, %v12
    %s16 = sshllo.u32 0, 1
    %v18 = vld [vmem:[#allocation0] sm:%s16]
    %s19 = sshllo.u32 0, 1
    %20 = vst [vmem:[%s1] sm:%s19] %v18

// kernel: residual_block.5
$region0: #{residual_block.5}
  #allocation0 [shape = 'u32[]', space=smem, size = 0x4, offset = 0x4, fixed_abs, tag = 'smem constant byte address 0x4 - core index']
  #allocation1 [shape = 'u32[144,128]{1,0:T(1,128)}', space=vmem, size = 0x12000, scoped, tag = 'internal scratch']
  #allocation2 [shape = 'f32[8,48]{1,0:T(8,128)}', space=vmem, size = 0x1000, scoped, tag = 'scratch operand']
  #allocation3 [shape = 'f32[8,48]{1,0:T(8,128)}', space=vmem, size = 0x1000, scoped, tag = 'scratch operand']
  %s0 = inlined_call_operand.vmem [shape: bf16[8,48], index: 0, kind: input, shape index: {}]
  %s1 = inlined_call_operand.vmem [shape: f32[8,1], index: 1, kind: input, shape index: {}]
  %s2 = inlined_call_operand.vmem [shape: f32[8,1], index: 2, kind: input, shape index: {}]
  %s3 = inlined_call_operand.vmem [shape: bf16[8,40], index: 3, kind: input, shape index: {}]
  %s4 = inlined_call_operand.vmem [shape: f32[1,48], index: 4, kind: input, shape index: {}]
  %s5 = inlined_call_operand.vmem [shape: bf16[8,48], index: 5, kind: output, shape index: {0}]
  %s6 = inlined_call_operand.vmem [shape: f32[1,8,2], index: 6, kind: output, shape index: {1}]
  %7 = xla_tuple %s5, %s6
  %s8 = sld [smem:[#allocation0]]
  $region46: #{residual_block.5} parent=0
    _
  %s10 = ssub.s32 1, %s8
  %s11 = scalar_select 0, %s10, %s8
  // Predicated region
  $region2: #{residual_block.5} parent=0 // pred_check
    _
  $region3: #{residual_block.5} parent=0 // pred_check_branch
    %13 = sbr.rel (0) target = $region5
  $region4: #{residual_block.5} parent=0 // pred_region
    %s14 = sadd.s32 0, 0
    %p15 = scmp.lt.s32.totalorder %s14, 0
    %s16 = scalar_select %p15, %s14, 0
    %s17 = smul.addr %s16, 4
    %s18 = scalar_lea.vmem %s0, %s17
    %s19 = sadd.s32 0, 0
  $region5: #{residual_block.5} parent=0 // pred_fallthru
    _
  // Predicated region
  $region6: #{residual_block.5} parent=0 // pred_check
    _
  $region7: #{residual_block.5} parent=0 // pred_check_branch
    %21 = sbr.rel (0) target = $region9
  $region8: #{residual_block.5} parent=0 // pred_region
    _
  $region9: #{residual_block.5} parent=0 // pred_fallthru
    _
  // Predicated region
  $region10: #{residual_block.5} parent=0 // pred_check
    _
  $region11: #{residual_block.5} parent=0 // pred_check_branch
    %23 = sbr.rel (0) target = $region13
  $region12: #{residual_block.5} parent=0 // pred_region
    _
  $region13: #{residual_block.5} parent=0 // pred_fallthru
    _
  // Predicated region
  $region14: #{residual_block.5} parent=0 // pred_check
    _
  $region15: #{residual_block.5} parent=0 // pred_check_branch
    %25 = sbr.rel (0) target = $region17
  $region16: #{residual_block.5} parent=0 // pred_region
    _
  $region17: #{residual_block.5} parent=0 // pred_fallthru
    _
  // Predicated region
  $region18: #{residual_block.5} parent=0 // pred_check
    _
  $region19: #{residual_block.5} parent=0 // pred_check_branch
    %27 = sbr.rel (0) target = $region21
  $region20: #{residual_block.5} parent=0 // pred_region
    _
  $region21: #{residual_block.5} parent=0 // pred_fallthru
    _
  %s28 = sadd.s32 0, 0
  %p29 = scmp.lt.s32.totalorder %s28, 0
  %s30 = scalar_select %p29, %s28, 0
  %s31 = smul.addr %s30, 4
  %s32 = scalar_lea.vmem %s0, %s31
  %s33 = sadd.s32 0, 0
  %p34 = scmp.lt.s32.totalorder %s33, 0
  %s35 = scalar_select %p34, %s33, 0
  %s36 = smul.addr %s35, 4
  %s37 = scalar_lea.vmem %s5, %s36
  %s38 = sadd.s32 0, 0
  %p39 = scmp.lt.s32.totalorder %s38, 0
  %s40 = scalar_select %p39, %s38, 0
  %s41 = smul.addr %s40, 4
  %s42 = scalar_lea.vmem %s0, %s41
  %s43 = sadd.s32 0, 0
  %s44 = sadd.s32 0, 0
  %p45 = scmp.lt.s32.totalorder %s44, 0
  %s46 = scalar_select %p45, %s44, 0
  %s47 = smul.addr %s46, 4
  %s48 = scalar_lea.vmem %s5, %s47
  %s49 = sadd.s32 0, 0
  %p51 = scmp.eq.s32.totalorder 0, 0
  // Predicated region
  $region22: #{residual_block.5} parent=0 // pred_check
    %p52 = pneg %p51
  $region23: #{residual_block.5} parent=0 // pred_check_branch
    %54 = sbr.rel (%p52) target = $region25
  $region24: #{residual_block.5} parent=0 // pred_region
    %vm55 = vcmask 392192
    %56 = vst.msk [vmem:[#allocation2] sm:$0xff] %vm55, 0.0
    %57 = vst.msk [vmem:[#allocation3] sm:$0xff] %vm55, 0.0
  $region25: #{residual_block.5} parent=0 // pred_fallthru
    _
  %v58 = vld [vmem:[%s42] sm:$0xf]
  %v59 = vunpack.c.l.bf16 %v58
  %v60 = vld [vmem:[%s1] sm:$0xff]
  %62 = vset.pattern.permute.xlu0 0
  %63 = vperm.xlu0 %62, %v60
  %v64 = vpop.permute.xlu0 %63
  %v66 = vmul.f32 %v59, %v64
  %v67 = vld [vmem:[%s2] sm:$0xff]
  %69 = vset.pattern.permute.xlu0 0
  %70 = vperm.xlu0 %69, %v67
  %v71 = vpop.permute.xlu0 %70
  %v73 = vadd.f32 %v66, %v71
  %v74 = vmax.f32 %v73, 0.0
  %v75 = vld [vmem:[%s4] sm:$0x1]
  %v77 = vlaneseq
  %v78 = vshrl.u32 %v77, 7
  %v79 = vsub.s32 0, %v78
  %v80 = vrot.slane %v75, %v79
  %v82 = vmul.f32 %v74, %v80
  %v83 = vpack.c.bf16 %v82, %v82
  %85 = vrot.lane.b32.xlu0 %v83, 4
  %v86 = vpop.permute.xlu0 %85
  %vm87 = vcmask 31744
  %v90 = vsel %vm87, 0, %v86
  %vm91 = vcmask 424960
  %v92 = vsel %vm91, %v90, 0
  %v94 = vrot.slane %v92, 4
  %95 = vrot.lane.b32.xlu0 %v94, 127
  %v96 = vpop.permute.xlu0 %95
  %97 = vrot.lane.b32.xlu0 %v92, 126
  %v98 = vpop.permute.xlu0 %97
  %99 = vrot.lane.b32.xlu0 %v94, 125
  %v100 = vpop.permute.xlu0 %99
  %101 = vrot.lane.b32.xlu0 %v92, 124
  %v102 = vpop.permute.xlu0 %101
  %vm103 = vcmask 1043456
  %v105 = vsel %vm103, %v92, %v96
  %v108 = vsel %vm103, %v98, %v100
  %v109 = vld [vmem:[%s3] sm:$0xf]
  %112 = vrot.lane.b32.xlu0 %v105, 126
  %v113 = vpop.permute.xlu0 %112
  %114 = vrot.lane.b32.xlu0 %v108, 126
  %v115 = vpop.permute.xlu0 %114
  %116 = vrot.lane.b32.xlu0 %v102, 126
  %v117 = vpop.permute.xlu0 %116
  %vm120 = vcmask 326656
  %v122 = vsel %vm120, %v109, 0
  %v125 = vsel %vm103, %v117, 0
  %127 = vmatprep.subr.bf16.mxu0 0
  %128 = vmatpush1.bf16.msra.mxu0 %v113
  %129 = vmatprep.subr.bf16.mxu0 0
  %130 = vmatpush1.bf16.msra.mxu0 %v115
  %131 = vmatprep.subr.bf16.mxu0 0
  %132 = vmatpush1.bf16.msra.mxu0 %v125
  %133 = vmatprep.subr.bf16.mxu0 0
  %134 = vmatpush1.bf16.msra.mxu0 0
  %135 = vmatprep.subr.bf16.mxu0 0
  %136 = vmatpush1.bf16.msra.mxu0 0
  %137 = vmatprep.subr.bf16.mxu0 0
  %138 = vmatpush1.bf16.msra.mxu0 0
  %139 = vmatprep.subr.bf16.mxu0 0
  %140 = vmatpush1.bf16.msra.mxu0 0
  %141 = vmatprep.subr.bf16.mxu0 0
  %142 = vmatpush1.bf16.msra.mxu0 0
  %143 = vmatprep.subr.bf16.mxu0 0
  %144 = vmatpush1.bf16.msra.mxu0 0
  %145 = vmatprep.subr.bf16.mxu0 0
  %146 = vmatpush1.bf16.msra.mxu0 0
  %147 = vmatprep.subr.bf16.mxu0 0
  %148 = vmatpush1.bf16.msra.mxu0 0
  %149 = vmatprep.subr.bf16.mxu0 0
  %150 = vmatpush1.bf16.msra.mxu0 0
  %151 = vmatprep.subr.bf16.mxu0 0
  %152 = vmatpush1.bf16.msra.mxu0 0
  %153 = vmatprep.subr.bf16.mxu0 0
  %154 = vmatpush1.bf16.msra.mxu0 0
  %155 = vmatprep.subr.bf16.mxu0 0
  %156 = vmatpush1.bf16.msra.mxu0 0
  %157 = vmatprep.subr.bf16.mxu0 0
  %158 = vmatpush1.bf16.msra.mxu0 0
  %159 = vmatprep.mubr.bf16.mxu0 0
  %160 = vmatmul.mubr.bf16.gmra.mrb[0].mxu0 %v122
  %v161 = vpop.f32.mrb[0].mxu0
  %v162 = vadd.f32 0.0, %v161
  %v163 = vpop.f32.mrb[0].mxu0
  %v164 = vpop.f32.mrb[0].mxu0
  %v165 = vpop.f32.mrb[0].mxu0
  %166 = vdwg.mxu0
  %v167 = vmul.f32 %v162, %v80
  %v168 = vld [vmem:[#allocation2] sm:$0xff]
  %v169 = vadd.f32 %v168, %v167
  %vm170 = vcmask 392192
  %171 = vst.msk [vmem:[#allocation2] sm:$0xff] %vm170, %v169
  %v172 = vld [vmem:[#allocation3] sm:$0xff]
  %v173 = vmul.f32 %v167, %v167
  %v174 = vadd.f32 %v172, %v173
  %175 = vst.msk [vmem:[#allocation3] sm:$0xff] %vm170, %v174
  %v176 = vpack.c.bf16 %v167, %v167
  %vm177 = vcmask 388096
  %178 = vst.msk [vmem:[%s48] sm:$0xf] %vm177, %v176
  // Predicated region
  $region26: #{residual_block.5} parent=0 // pred_check
    %p179 = pneg %p51
  $region27: #{residual_block.5} parent=0 // pred_check_branch
    %181 = sbr.rel (%p179) target = $region29
  $region28: #{residual_block.5} parent=0 // pred_region
    %v182 = vld [vmem:[#allocation2] sm:$0xff]
    %v183 = vsel %vm170, %v182, 0.0
    %184 = vadd.xlane.f32.xlu0 %v183
    %v185 = vpop.xlane.xlu0 %184
    %v186 = vld [vmem:[#allocation3] sm:$0xff]
    %v187 = vsel %vm170, %v186, 0.0
    %188 = vadd.xlane.f32.xlu0 %v187
    %v189 = vpop.xlane.xlu0 %188
    %vm190 = vcmask 7168
    %v191 = vsel %vm190, %v185, %v189
    %vm192 = vcmask 15360
    %193 = vst.msk [vmem:[%s6] sm:$0xff] %vm192, %v191
  $region29: #{residual_block.5} parent=0 // pred_fallthru
    _
  %s194 = sadd.s32 0, 0
  %p195 = scmp.lt.s32.totalorder %s194, 0
  %s196 = scalar_select %p195, %s194, 0
  %s197 = smul.addr %s196, 4
  %s198 = scalar_lea.vmem %s5, %s197
  // Predicated region
  $region30: #{residual_block.5} parent=0 // pred_check
    _
  $region31: #{residual_block.5} parent=0 // pred_check_branch
    %200 = sbr.rel (0) target = $region33
  $region32: #{residual_block.5} parent=0 // pred_region
    %s201 = sadd.s32 0, 0
  $region33: #{residual_block.5} parent=0 // pred_fallthru
    _
  // Predicated region
  $region34: #{residual_block.5} parent=0 // pred_check
    _
  $region35: #{residual_block.5} parent=0 // pred_check_branch
    %203 = sbr.rel (0) target = $region37
  $region36: #{residual_block.5} parent=0 // pred_region
    _
  $region37: #{residual_block.5} parent=0 // pred_fallthru
    _
  // Predicated region
  $region38: #{residual_block.5} parent=0 // pred_check
    _
  $region39: #{residual_block.5} parent=0 // pred_check_branch
    %205 = sbr.rel (0) target = $region41
  $region40: #{residual_block.5} parent=0 // pred_region
    %s206 = sadd.s32 0, 0
    %p207 = scmp.lt.s32.totalorder %s206, 0
    %s208 = scalar_select %p207, %s206, 0
    %s209 = smul.addr %s208, 4
    %s210 = scalar_lea.vmem %s5, %s209
  $region41: #{residual_block.5} parent=0 // pred_fallthru
    _
  // Predicated region
  $region42: #{residual_block.5} parent=0 // pred_check
    _
  $region43: #{residual_block.5} parent=0 // pred_check_branch
    %212 = sbr.rel (0) target = $region45
  $region44: #{residual_block.5} parent=0 // pred_region
    _
  $region45: #{residual_block.5} parent=0 // pred_fallthru
    _

// kernel: residual_block.7
$region0: #{residual_block.7}
  #allocation0 [shape = 'u32[]', space=smem, size = 0x4, offset = 0x4, fixed_abs, tag = 'smem constant byte address 0x4 - core index']
  #allocation1 [shape = 'u32[144,128]{1,0:T(1,128)}', space=vmem, size = 0x12000, scoped, tag = 'internal scratch']
  %s0 = inlined_call_operand.vmem [shape: bf16[8,48], index: 0, kind: input, shape index: {}]
  %s1 = inlined_call_operand.vmem [shape: f32[8,1], index: 1, kind: input, shape index: {}]
  %s2 = inlined_call_operand.vmem [shape: f32[8,1], index: 2, kind: input, shape index: {}]
  %s3 = inlined_call_operand.vmem [shape: bf16[4,48], index: 3, kind: input, shape index: {}]
  %s4 = inlined_call_operand.vmem [shape: bf16[8,4], index: 4, kind: input, shape index: {}]
  %s5 = inlined_call_operand.vmem [shape: f32[8,48], index: 5, kind: output, shape index: {}]
  %s6 = sld [smem:[#allocation0]]
  $region30: #{residual_block.7} parent=0
    _
  %s8 = ssub.s32 1, %s6
  %s9 = scalar_select 0, %s8, %s6
  // Predicated region
  $region2: #{residual_block.7} parent=0 // pred_check
    _
  $region3: #{residual_block.7} parent=0 // pred_check_branch
    %11 = sbr.rel (0) target = $region5
  $region4: #{residual_block.7} parent=0 // pred_region
    _
  $region5: #{residual_block.7} parent=0 // pred_fallthru
    _
  // Predicated region
  $region6: #{residual_block.7} parent=0 // pred_check
    _
  $region7: #{residual_block.7} parent=0 // pred_check_branch
    %13 = sbr.rel (0) target = $region9
  $region8: #{residual_block.7} parent=0 // pred_region
    _
  $region9: #{residual_block.7} parent=0 // pred_fallthru
    _
  // Predicated region
  $region10: #{residual_block.7} parent=0 // pred_check
    _
  $region11: #{residual_block.7} parent=0 // pred_check_branch
    %15 = sbr.rel (0) target = $region13
  $region12: #{residual_block.7} parent=0 // pred_region
    _
  $region13: #{residual_block.7} parent=0 // pred_fallthru
    _
  // Predicated region
  $region14: #{residual_block.7} parent=0 // pred_check
    _
  $region15: #{residual_block.7} parent=0 // pred_check_branch
    %17 = sbr.rel (0) target = $region17
  $region16: #{residual_block.7} parent=0 // pred_region
    _
  $region17: #{residual_block.7} parent=0 // pred_fallthru
    _
  // Predicated region
  $region18: #{residual_block.7} parent=0 // pred_check
    _
  $region19: #{residual_block.7} parent=0 // pred_check_branch
    %19 = sbr.rel (0) target = $region21
  $region20: #{residual_block.7} parent=0 // pred_region
    _
  $region21: #{residual_block.7} parent=0 // pred_fallthru
    _
  %v21 = vld [vmem:[%s0] sm:$0xf]
  %v22 = vunpack.c.l.bf16 %v21
  %v23 = vld [vmem:[%s1] sm:$0xff]
  %25 = vset.pattern.permute.xlu0 0
  %26 = vperm.xlu0 %25, %v23
  %v27 = vpop.permute.xlu0 %26
  %v29 = vmul.f32 %v22, %v27
  %v30 = vld [vmem:[%s2] sm:$0xff]
  %32 = vset.pattern.permute.xlu0 0
  %33 = vperm.xlu0 %32, %v30
  %v34 = vpop.permute.xlu0 %33
  %v36 = vadd.f32 %v29, %v34
  %v37 = vmax.f32 %v36, 0.0
  %v38 = vld [vmem:[%s4] sm:$0xf]
  %v39 = vld [vmem:[%s3] sm:$0x3]
  %vm40 = vcmask 31744
  %v42 = vsel %vm40, %v38, 0
  %vm44 = vcmask 1041408
  %v46 = vsel %vm44, %v39, 0
  %48 = vmatprep.subr.bf16.mxu0 0
  %49 = vmatpush1.bf16.msra.mxu0 %v46
  %50 = vmatprep.subr.bf16.mxu0 0
  %51 = vmatpush1.bf16.msra.mxu0 0
  %52 = vmatprep.subr.bf16.mxu0 0
  %53 = vmatpush1.bf16.msra.mxu0 0
  %54 = vmatprep.subr.bf16.mxu0 0
  %55 = vmatpush1.bf16.msra.mxu0 0
  %56 = vmatprep.subr.bf16.mxu0 0
  %57 = vmatpush1.bf16.msra.mxu0 0
  %58 = vmatprep.subr.bf16.mxu0 0
  %59 = vmatpush1.bf16.msra.mxu0 0
  %60 = vmatprep.subr.bf16.mxu0 0
  %61 = vmatpush1.bf16.msra.mxu0 0
  %62 = vmatprep.subr.bf16.mxu0 0
  %63 = vmatpush1.bf16.msra.mxu0 0
  %64 = vmatprep.subr.bf16.mxu0 0
  %65 = vmatpush1.bf16.msra.mxu0 0
  %66 = vmatprep.subr.bf16.mxu0 0
  %67 = vmatpush1.bf16.msra.mxu0 0
  %68 = vmatprep.subr.bf16.mxu0 0
  %69 = vmatpush1.bf16.msra.mxu0 0
  %70 = vmatprep.subr.bf16.mxu0 0
  %71 = vmatpush1.bf16.msra.mxu0 0
  %72 = vmatprep.subr.bf16.mxu0 0
  %73 = vmatpush1.bf16.msra.mxu0 0
  %74 = vmatprep.subr.bf16.mxu0 0
  %75 = vmatpush1.bf16.msra.mxu0 0
  %76 = vmatprep.subr.bf16.mxu0 0
  %77 = vmatpush1.bf16.msra.mxu0 0
  %78 = vmatprep.subr.bf16.mxu0 0
  %79 = vmatpush1.bf16.msra.mxu0 0
  %80 = vmatprep.mubr.bf16.mxu0 0
  %81 = vmatmul.mubr.bf16.gmra.mrb[0].mxu0 %v42
  %v82 = vpop.f32.mrb[0].mxu0
  %v83 = vadd.f32 0.0, %v82
  %v84 = vpop.f32.mrb[0].mxu0
  %v85 = vpop.f32.mrb[0].mxu0
  %v86 = vpop.f32.mrb[0].mxu0
  %87 = vdwg.mxu0
  %v88 = vadd.f32 %v37, %v83
  %vm89 = vcmask 392192
  %90 = vst.msk [vmem:[%s5] sm:$0xff] %vm89, %v88
  // Predicated region
  $region22: #{residual_block.7} parent=0 // pred_check
    _
  $region23: #{residual_block.7} parent=0 // pred_check_branch
    %92 = sbr.rel (0) target = $region25
  $region24: #{residual_block.7} parent=0 // pred_region
    _
  $region25: #{residual_block.7} parent=0 // pred_fallthru
    _
  // Predicated region
  $region26: #{residual_block.7} parent=0 // pred_check
    _
  $region27: #{residual_block.7} parent=0 // pred_check_branch
    %94 = sbr.rel (0) target = $region29
  $region28: #{residual_block.7} parent=0 // pred_region
    _
  $region29: #{residual_block.7} parent=0 // pred_fallthru
    _

// kernel: residual_block.6
$region0: #{residual_block.6}
  #allocation0 [shape = 'u32[]', space=smem, size = 0x4, offset = 0x4, fixed_abs, tag = 'smem constant byte address 0x4 - core index']
  #allocation1 [shape = 'u32[144,128]{1,0:T(1,128)}', space=vmem, size = 0x12000, scoped, tag = 'internal scratch']
  #allocation2 [shape = 'f32[8,48]{1,0:T(8,128)}', space=vmem, size = 0x1000, scoped, tag = 'scratch operand']
  #allocation3 [shape = 'f32[8,48]{1,0:T(8,128)}', space=vmem, size = 0x1000, scoped, tag = 'scratch operand']
  %s0 = inlined_call_operand.vmem [shape: bf16[8,48], index: 0, kind: input, shape index: {}]
  %s1 = inlined_call_operand.vmem [shape: f32[8,1], index: 1, kind: input, shape index: {}]
  %s2 = inlined_call_operand.vmem [shape: f32[8,1], index: 2, kind: input, shape index: {}]
  %s3 = inlined_call_operand.vmem [shape: bf16[8,24], index: 3, kind: input, shape index: {}]
  %s4 = inlined_call_operand.vmem [shape: f32[1,48], index: 4, kind: input, shape index: {}]
  %s5 = inlined_call_operand.vmem [shape: bf16[8,48], index: 5, kind: output, shape index: {0}]
  %s6 = inlined_call_operand.vmem [shape: f32[1,8,2], index: 6, kind: output, shape index: {1}]
  %7 = xla_tuple %s5, %s6
  %s8 = sld [smem:[#allocation0]]
  $region46: #{residual_block.6} parent=0
    _
  %s10 = ssub.s32 1, %s8
  %s11 = scalar_select 0, %s10, %s8
  // Predicated region
  $region2: #{residual_block.6} parent=0 // pred_check
    _
  $region3: #{residual_block.6} parent=0 // pred_check_branch
    %13 = sbr.rel (0) target = $region5
  $region4: #{residual_block.6} parent=0 // pred_region
    %s14 = sadd.s32 0, 0
    %p15 = scmp.lt.s32.totalorder %s14, 0
    %s16 = scalar_select %p15, %s14, 0
    %s17 = smul.addr %s16, 4
    %s18 = scalar_lea.vmem %s0, %s17
    %s19 = sadd.s32 0, 0
  $region5: #{residual_block.6} parent=0 // pred_fallthru
    _
  // Predicated region
  $region6: #{residual_block.6} parent=0 // pred_check
    _
  $region7: #{residual_block.6} parent=0 // pred_check_branch
    %21 = sbr.rel (0) target = $region9
  $region8: #{residual_block.6} parent=0 // pred_region
    _
  $region9: #{residual_block.6} parent=0 // pred_fallthru
    _
  // Predicated region
  $region10: #{residual_block.6} parent=0 // pred_check
    _
  $region11: #{residual_block.6} parent=0 // pred_check_branch
    %23 = sbr.rel (0) target = $region13
  $region12: #{residual_block.6} parent=0 // pred_region
    _
  $region13: #{residual_block.6} parent=0 // pred_fallthru
    _
  // Predicated region
  $region14: #{residual_block.6} parent=0 // pred_check
    _
  $region15: #{residual_block.6} parent=0 // pred_check_branch
    %25 = sbr.rel (0) target = $region17
  $region16: #{residual_block.6} parent=0 // pred_region
    _
  $region17: #{residual_block.6} parent=0 // pred_fallthru
    _
  // Predicated region
  $region18: #{residual_block.6} parent=0 // pred_check
    _
  $region19: #{residual_block.6} parent=0 // pred_check_branch
    %27 = sbr.rel (0) target = $region21
  $region20: #{residual_block.6} parent=0 // pred_region
    _
  $region21: #{residual_block.6} parent=0 // pred_fallthru
    _
  %s28 = sadd.s32 0, 0
  %p29 = scmp.lt.s32.totalorder %s28, 0
  %s30 = scalar_select %p29, %s28, 0
  %s31 = smul.addr %s30, 4
  %s32 = scalar_lea.vmem %s0, %s31
  %s33 = sadd.s32 0, 0
  %p34 = scmp.lt.s32.totalorder %s33, 0
  %s35 = scalar_select %p34, %s33, 0
  %s36 = smul.addr %s35, 4
  %s37 = scalar_lea.vmem %s5, %s36
  %s38 = sadd.s32 0, 0
  %p39 = scmp.lt.s32.totalorder %s38, 0
  %s40 = scalar_select %p39, %s38, 0
  %s41 = smul.addr %s40, 4
  %s42 = scalar_lea.vmem %s0, %s41
  %s43 = sadd.s32 0, 0
  %s44 = sadd.s32 0, 0
  %p45 = scmp.lt.s32.totalorder %s44, 0
  %s46 = scalar_select %p45, %s44, 0
  %s47 = smul.addr %s46, 4
  %s48 = scalar_lea.vmem %s5, %s47
  %s49 = sadd.s32 0, 0
  %p51 = scmp.eq.s32.totalorder 0, 0
  // Predicated region
  $region22: #{residual_block.6} parent=0 // pred_check
    %p52 = pneg %p51
  $region23: #{residual_block.6} parent=0 // pred_check_branch
    %54 = sbr.rel (%p52) target = $region25
  $region24: #{residual_block.6} parent=0 // pred_region
    %vm55 = vcmask 392192
    %56 = vst.msk [vmem:[#allocation2] sm:$0xff] %vm55, 0.0
    %57 = vst.msk [vmem:[#allocation3] sm:$0xff] %vm55, 0.0
  $region25: #{residual_block.6} parent=0 // pred_fallthru
    _
  %v58 = vld [vmem:[%s42] sm:$0xf]
  %v59 = vunpack.c.l.bf16 %v58
  %v60 = vld [vmem:[%s1] sm:$0xff]
  %62 = vset.pattern.permute.xlu0 0
  %63 = vperm.xlu0 %62, %v60
  %v64 = vpop.permute.xlu0 %63
  %v66 = vmul.f32 %v59, %v64
  %v67 = vld [vmem:[%s2] sm:$0xff]
  %69 = vset.pattern.permute.xlu0 0
  %70 = vperm.xlu0 %69, %v67
  %v71 = vpop.permute.xlu0 %70
  %v73 = vadd.f32 %v66, %v71
  %v74 = vmax.f32 %v73, 0.0
  %v75 = vld [vmem:[%s4] sm:$0x1]
  %v77 = vlaneseq
  %v78 = vshrl.u32 %v77, 7
  %v79 = vsub.s32 0, %v78
  %v80 = vrot.slane %v75, %v79
  %v82 = vmul.f32 %v74, %v80
  %v83 = vpack.c.bf16 %v82, %v82
  %85 = vrot.lane.b32.xlu0 %v83, 4
  %v86 = vpop.permute.xlu0 %85
  %vm87 = vcmask 31744
  %v90 = vsel %vm87, 0, %v86
  %vm91 = vcmask 424960
  %v92 = vsel %vm91, %v90, 0
  %v94 = vrot.slane %v92, 4
  %95 = vrot.lane.b32.xlu0 %v94, 127
  %v96 = vpop.permute.xlu0 %95
  %97 = vrot.lane.b32.xlu0 %v92, 126
  %v98 = vpop.permute.xlu0 %97
  %vm99 = vcmask 1043456
  %v101 = vsel %vm99, %v92, %v96
  %v102 = vld [vmem:[%s3] sm:$0xf]
  %104 = vrot.lane.b32.xlu0 %v101, 125
  %v105 = vpop.permute.xlu0 %104
  %106 = vrot.lane.b32.xlu0 %v98, 125
  %v107 = vpop.permute.xlu0 %106
  %vm109 = vcmask 195584
  %v111 = vsel %vm109, %v102, 0
  %v114 = vsel %vm99, %v107, 0
  %116 = vmatprep.subr.bf16.mxu0 0
  %117 = vmatpush1.bf16.msra.mxu0 %v105
  %118 = vmatprep.subr.bf16.mxu0 0
  %119 = vmatpush1.bf16.msra.mxu0 %v114
  %120 = vmatprep.subr.bf16.mxu0 0
  %121 = vmatpush1.bf16.msra.mxu0 0
  %122 = vmatprep.subr.bf16.mxu0 0
  %123 = vmatpush1.bf16.msra.mxu0 0
  %124 = vmatprep.subr.bf16.mxu0 0
  %125 = vmatpush1.bf16.msra.mxu0 0
  %126 = vmatprep.subr.bf16.mxu0 0
  %127 = vmatpush1.bf16.msra.mxu0 0
  %128 = vmatprep.subr.bf16.mxu0 0
  %129 = vmatpush1.bf16.msra.mxu0 0
  %130 = vmatprep.subr.bf16.mxu0 0
  %131 = vmatpush1.bf16.msra.mxu0 0
  %132 = vmatprep.subr.bf16.mxu0 0
  %133 = vmatpush1.bf16.msra.mxu0 0
  %134 = vmatprep.subr.bf16.mxu0 0
  %135 = vmatpush1.bf16.msra.mxu0 0
  %136 = vmatprep.subr.bf16.mxu0 0
  %137 = vmatpush1.bf16.msra.mxu0 0
  %138 = vmatprep.subr.bf16.mxu0 0
  %139 = vmatpush1.bf16.msra.mxu0 0
  %140 = vmatprep.subr.bf16.mxu0 0
  %141 = vmatpush1.bf16.msra.mxu0 0
  %142 = vmatprep.subr.bf16.mxu0 0
  %143 = vmatpush1.bf16.msra.mxu0 0
  %144 = vmatprep.subr.bf16.mxu0 0
  %145 = vmatpush1.bf16.msra.mxu0 0
  %146 = vmatprep.subr.bf16.mxu0 0
  %147 = vmatpush1.bf16.msra.mxu0 0
  %148 = vmatprep.mubr.bf16.mxu0 0
  %149 = vmatmul.mubr.bf16.gmra.mrb[0].mxu0 %v111
  %v150 = vpop.f32.mrb[0].mxu0
  %v151 = vadd.f32 0.0, %v150
  %v152 = vpop.f32.mrb[0].mxu0
  %v153 = vpop.f32.mrb[0].mxu0
  %v154 = vpop.f32.mrb[0].mxu0
  %155 = vdwg.mxu0
  %v156 = vmul.f32 %v151, %v80
  %v157 = vld [vmem:[#allocation2] sm:$0xff]
  %v158 = vadd.f32 %v157, %v156
  %vm159 = vcmask 392192
  %160 = vst.msk [vmem:[#allocation2] sm:$0xff] %vm159, %v158
  %v161 = vld [vmem:[#allocation3] sm:$0xff]
  %v162 = vmul.f32 %v156, %v156
  %v163 = vadd.f32 %v161, %v162
  %164 = vst.msk [vmem:[#allocation3] sm:$0xff] %vm159, %v163
  %v165 = vpack.c.bf16 %v156, %v156
  %vm166 = vcmask 388096
  %167 = vst.msk [vmem:[%s48] sm:$0xf] %vm166, %v165
  // Predicated region
  $region26: #{residual_block.6} parent=0 // pred_check
    %p168 = pneg %p51
  $region27: #{residual_block.6} parent=0 // pred_check_branch
    %170 = sbr.rel (%p168) target = $region29
  $region28: #{residual_block.6} parent=0 // pred_region
    %v171 = vld [vmem:[#allocation2] sm:$0xff]
    %v172 = vsel %vm159, %v171, 0.0
    %173 = vadd.xlane.f32.xlu0 %v172
    %v174 = vpop.xlane.xlu0 %173
    %v175 = vld [vmem:[#allocation3] sm:$0xff]
    %v176 = vsel %vm159, %v175, 0.0
    %177 = vadd.xlane.f32.xlu0 %v176
    %v178 = vpop.xlane.xlu0 %177
    %vm179 = vcmask 7168
    %v180 = vsel %vm179, %v174, %v178
    %vm181 = vcmask 15360
    %182 = vst.msk [vmem:[%s6] sm:$0xff] %vm181, %v180
  $region29: #{residual_block.6} parent=0 // pred_fallthru
    _
  %s183 = sadd.s32 0, 0
  %p184 = scmp.lt.s32.totalorder %s183, 0
  %s185 = scalar_select %p184, %s183, 0
  %s186 = smul.addr %s185, 4
  %s187 = scalar_lea.vmem %s5, %s186
  // Predicated region
  $region30: #{residual_block.6} parent=0 // pred_check
    _
  $region31: #{residual_block.6} parent=0 // pred_check_branch
    %189 = sbr.rel (0) target = $region33
  $region32: #{residual_block.6} parent=0 // pred_region
    %s190 = sadd.s32 0, 0
  $region33: #{residual_block.6} parent=0 // pred_fallthru
    _
  // Predicated region
  $region34: #{residual_block.6} parent=0 // pred_check
    _
  $region35: #{residual_block.6} parent=0 // pred_check_branch
    %192 = sbr.rel (0) target = $region37
  $region36: #{residual_block.6} parent=0 // pred_region
    _
  $region37: #{residual_block.6} parent=0 // pred_fallthru
    _
  // Predicated region
  $region38: #{residual_block.6} parent=0 // pred_check
    _
  $region39: #{residual_block.6} parent=0 // pred_check_branch
    %194 = sbr.rel (0) target = $region41
  $region40: #{residual_block.6} parent=0 // pred_region
    %s195 = sadd.s32 0, 0
    %p196 = scmp.lt.s32.totalorder %s195, 0
    %s197 = scalar_select %p196, %s195, 0
    %s198 = smul.addr %s197, 4
    %s199 = scalar_lea.vmem %s5, %s198
  $region41: #{residual_block.6} parent=0 // pred_fallthru
    _
  // Predicated region
  $region42: #{residual_block.6} parent=0 // pred_check
    _
  $region43: #{residual_block.6} parent=0 // pred_check_branch
    %201 = sbr.rel (0) target = $region45
  $region44: #{residual_block.6} parent=0 // pred_region
    _
  $region45: #{residual_block.6} parent=0 // pred_fallthru
    _

// kernel: residual_block.4
$region0: #{residual_block.4}
  #allocation0 [shape = 'u32[]', space=smem, size = 0x4, offset = 0x4, fixed_abs, tag = 'smem constant byte address 0x4 - core index']
  #allocation1 [shape = 'u32[144,128]{1,0:T(1,128)}', space=vmem, size = 0x12000, scoped, tag = 'internal scratch']
  #allocation2 [shape = 'f32[8,48]{1,0:T(8,128)}', space=vmem, size = 0x1000, scoped, tag = 'scratch operand']
  #allocation3 [shape = 'f32[8,48]{1,0:T(8,128)}', space=vmem, size = 0x1000, scoped, tag = 'scratch operand']
  %s0 = inlined_call_operand.vmem [shape: bf16[4,48], index: 0, kind: input, shape index: {}]
  %s1 = inlined_call_operand.vmem [shape: f32[4,1], index: 1, kind: input, shape index: {}]
  %s2 = inlined_call_operand.vmem [shape: f32[4,1], index: 2, kind: input, shape index: {}]
  %s3 = inlined_call_operand.vmem [shape: bf16[8,32], index: 3, kind: input, shape index: {}]
  %s4 = inlined_call_operand.vmem [shape: f32[1,48], index: 4, kind: input, shape index: {}]
  %s5 = inlined_call_operand.vmem [shape: bf16[8,48], index: 5, kind: output, shape index: {0}]
  %s6 = inlined_call_operand.vmem [shape: f32[1,8,2], index: 6, kind: output, shape index: {1}]
  %7 = xla_tuple %s5, %s6
  %s8 = sld [smem:[#allocation0]]
  $region46: #{residual_block.4} parent=0
    _
  %s10 = ssub.s32 1, %s8
  %s11 = scalar_select 0, %s10, %s8
  // Predicated region
  $region2: #{residual_block.4} parent=0 // pred_check
    _
  $region3: #{residual_block.4} parent=0 // pred_check_branch
    %13 = sbr.rel (0) target = $region5
  $region4: #{residual_block.4} parent=0 // pred_region
    %s14 = sadd.s32 0, 0
    %p15 = scmp.lt.s32.totalorder %s14, 0
    %s16 = scalar_select %p15, %s14, 0
    %s17 = smul.addr %s16, 2
    %s18 = scalar_lea.vmem %s0, %s17
    %s19 = sadd.s32 0, 0
  $region5: #{residual_block.4} parent=0 // pred_fallthru
    _
  // Predicated region
  $region6: #{residual_block.4} parent=0 // pred_check
    _
  $region7: #{residual_block.4} parent=0 // pred_check_branch
    %21 = sbr.rel (0) target = $region9
  $region8: #{residual_block.4} parent=0 // pred_region
    _
  $region9: #{residual_block.4} parent=0 // pred_fallthru
    _
  // Predicated region
  $region10: #{residual_block.4} parent=0 // pred_check
    _
  $region11: #{residual_block.4} parent=0 // pred_check_branch
    %23 = sbr.rel (0) target = $region13
  $region12: #{residual_block.4} parent=0 // pred_region
    _
  $region13: #{residual_block.4} parent=0 // pred_fallthru
    _
  // Predicated region
  $region14: #{residual_block.4} parent=0 // pred_check
    _
  $region15: #{residual_block.4} parent=0 // pred_check_branch
    %25 = sbr.rel (0) target = $region17
  $region16: #{residual_block.4} parent=0 // pred_region
    _
  $region17: #{residual_block.4} parent=0 // pred_fallthru
    _
  // Predicated region
  $region18: #{residual_block.4} parent=0 // pred_check
    _
  $region19: #{residual_block.4} parent=0 // pred_check_branch
    %27 = sbr.rel (0) target = $region21
  $region20: #{residual_block.4} parent=0 // pred_region
    _
  $region21: #{residual_block.4} parent=0 // pred_fallthru
    _
  %s28 = sadd.s32 0, 0
  %p29 = scmp.lt.s32.totalorder %s28, 0
  %s30 = scalar_select %p29, %s28, 0
  %s31 = smul.addr %s30, 2
  %s32 = scalar_lea.vmem %s0, %s31
  %s33 = sadd.s32 0, 0
  %p34 = scmp.lt.s32.totalorder %s33, 0
  %s35 = scalar_select %p34, %s33, 0
  %s36 = smul.addr %s35, 4
  %s37 = scalar_lea.vmem %s5, %s36
  %s38 = sadd.s32 0, 0
  %p39 = scmp.lt.s32.totalorder %s38, 0
  %s40 = scalar_select %p39, %s38, 0
  %s41 = smul.addr %s40, 2
  %s42 = scalar_lea.vmem %s0, %s41
  %s43 = sadd.s32 0, 0
  %s44 = sadd.s32 0, 0
  %p45 = scmp.lt.s32.totalorder %s44, 0
  %s46 = scalar_select %p45, %s44, 0
  %s47 = smul.addr %s46, 4
  %s48 = scalar_lea.vmem %s5, %s47
  %s49 = sadd.s32 0, 0
  %p51 = scmp.eq.s32.totalorder 0, 0
  // Predicated region
  $region22: #{residual_block.4} parent=0 // pred_check
    %p52 = pneg %p51
  $region23: #{residual_block.4} parent=0 // pred_check_branch
    %54 = sbr.rel (%p52) target = $region25
  $region24: #{residual_block.4} parent=0 // pred_region
    %vm55 = vcmask 392192
    %56 = vst.msk [vmem:[#allocation2] sm:$0xff] %vm55, 0.0
    %57 = vst.msk [vmem:[#allocation3] sm:$0xff] %vm55, 0.0
  $region25: #{residual_block.4} parent=0 // pred_fallthru
    _
  %v58 = vld [vmem:[%s42] sm:$0x3]
  %v61 = vunpack.c.l.s4 1983009808
  %v62 = vunpack.c.0.s8 %v61
  %v63 = vlaneseq
  %v64 = vshrl.u32 %v63, 7
  %v65 = vsub.s32 %v62, %v64
  %v66 = vrot.slane %v58, %v65
  %67 = vrot.lane.b32.xlu0 %v66, 4
  %v68 = vpop.permute.xlu0 %67
  %vm69 = vcmask 31744
  %v72 = vsel %vm69, 0, %v68
  %vm73 = vcmask 424960
  %v74 = vsel %vm73, %v72, 0
  %v76 = vrot.slane %v74, 6
  %77 = vrot.lane.b32.xlu0 %v76, 127
  %v78 = vpop.permute.xlu0 %77
  %v79 = vrot.slane %v74, 4
  %80 = vrot.lane.b32.xlu0 %v79, 126
  %v81 = vpop.permute.xlu0 %80
  %v82 = vrot.slane %v74, 2
  %83 = vrot.lane.b32.xlu0 %v82, 125
  %v84 = vpop.permute.xlu0 %83
  %85 = vrot.lane.b32.xlu0 %v74, 124
  %v86 = vpop.permute.xlu0 %85
  %87 = vrot.lane.b32.xlu0 %v76, 123
  %v88 = vpop.permute.xlu0 %87
  %89 = vrot.lane.b32.xlu0 %v79, 122
  %v90 = vpop.permute.xlu0 %89
  %91 = vrot.lane.b32.xlu0 %v82, 121
  %v92 = vpop.permute.xlu0 %91
  %vm93 = vcmask 1041408
  %v95 = vsel %vm93, %v74, %v78
  %vm96 = vcmask 1043456
  %v98 = vsel %vm96, %v95, %v81
  %vm99 = vcmask 1045504
  %v101 = vsel %vm99, %v98, %v84
  %v104 = vsel %vm93, %v86, %v88
  %v106 = vsel %vm96, %v104, %v90
  %v108 = vsel %vm99, %v106, %v92
  %v109 = vld [vmem:[%s3] sm:$0xf]
  %112 = vrot.lane.b32.xlu0 %v101, 127
  %v113 = vpop.permute.xlu0 %112
  %114 = vrot.lane.b32.xlu0 %v108, 127
  %v115 = vpop.permute.xlu0 %114
  %vm118 = vcmask 261120
  %v120 = vsel %vm118, %v109, 0
  %122 = vmatprep.subr.bf16.mxu0 0
  %123 = vmatpush1.bf16.msra.mxu0 %v113
  %124 = vmatprep.subr.bf16.mxu0 0
  %125 = vmatpush1.bf16.msra.mxu0 %v115
  %126 = vmatprep.subr.bf16.mxu0 0
  %127 = vmatpush1.bf16.msra.mxu0 0
  %128 = vmatprep.subr.bf16.mxu0 0
  %129 = vmatpush1.bf16.msra.mxu0 0
  %130 = vmatprep.subr.bf16.mxu0 0
  %131 = vmatpush1.bf16.msra.mxu0 0
  %132 = vmatprep.subr.bf16.mxu0 0
  %133 = vmatpush1.bf16.msra.mxu0 0
  %134 = vmatprep.subr.bf16.mxu0 0
  %135 = vmatpush1.bf16.msra.mxu0 0
  %136 = vmatprep.subr.bf16.mxu0 0
  %137 = vmatpush1.bf16.msra.mxu0 0
  %138 = vmatprep.subr.bf16.mxu0 0
  %139 = vmatpush1.bf16.msra.mxu0 0
  %140 = vmatprep.subr.bf16.mxu0 0
  %141 = vmatpush1.bf16.msra.mxu0 0
  %142 = vmatprep.subr.bf16.mxu0 0
  %143 = vmatpush1.bf16.msra.mxu0 0
  %144 = vmatprep.subr.bf16.mxu0 0
  %145 = vmatpush1.bf16.msra.mxu0 0
  %146 = vmatprep.subr.bf16.mxu0 0
  %147 = vmatpush1.bf16.msra.mxu0 0
  %148 = vmatprep.subr.bf16.mxu0 0
  %149 = vmatpush1.bf16.msra.mxu0 0
  %150 = vmatprep.subr.bf16.mxu0 0
  %151 = vmatpush1.bf16.msra.mxu0 0
  %152 = vmatprep.subr.bf16.mxu0 0
  %153 = vmatpush1.bf16.msra.mxu0 0
  %154 = vmatprep.mubr.bf16.mxu0 0
  %155 = vmatmul.mubr.bf16.gmra.mrb[0].mxu0 %v120
  %v156 = vpop.f32.mrb[0].mxu0
  %v157 = vadd.f32 0.0, %v156
  %v158 = vpop.f32.mrb[0].mxu0
  %v159 = vpop.f32.mrb[0].mxu0
  %v160 = vpop.f32.mrb[0].mxu0
  %161 = vdwg.mxu0
  %v162 = vld [vmem:[%s4] sm:$0x1]
  %v164 = vlaneseq
  %v165 = vshrl.u32 %v164, 7
  %v166 = vsub.s32 0, %v165
  %v167 = vrot.slane %v162, %v166
  %v169 = vmul.f32 %v157, %v167
  %v170 = vld [vmem:[#allocation2] sm:$0xff]
  %v171 = vadd.f32 %v170, %v169
  %vm172 = vcmask 392192
  %173 = vst.msk [vmem:[#allocation2] sm:$0xff] %vm172, %v171
  %v174 = vld [vmem:[#allocation3] sm:$0xff]
  %v175 = vmul.f32 %v169, %v169
  %v176 = vadd.f32 %v174, %v175
  %177 = vst.msk [vmem:[#allocation3] sm:$0xff] %vm172, %v176
  %v178 = vpack.c.bf16 %v169, %v169
  %vm179 = vcmask 388096
  %180 = vst.msk [vmem:[%s48] sm:$0xf] %vm179, %v178
  // Predicated region
  $region26: #{residual_block.4} parent=0 // pred_check
    %p181 = pneg %p51
  $region27: #{residual_block.4} parent=0 // pred_check_branch
    %183 = sbr.rel (%p181) target = $region29
  $region28: #{residual_block.4} parent=0 // pred_region
    %v184 = vld [vmem:[#allocation2] sm:$0xff]
    %v185 = vsel %vm172, %v184, 0.0
    %186 = vadd.xlane.f32.xlu0 %v185
    %v187 = vpop.xlane.xlu0 %186
    %v188 = vld [vmem:[#allocation3] sm:$0xff]
    %v189 = vsel %vm172, %v188, 0.0
    %190 = vadd.xlane.f32.xlu0 %v189
    %v191 = vpop.xlane.xlu0 %190
    %vm192 = vcmask 7168
    %v193 = vsel %vm192, %v187, %v191
    %vm194 = vcmask 15360
    %195 = vst.msk [vmem:[%s6] sm:$0xff] %vm194, %v193
  $region29: #{residual_block.4} parent=0 // pred_fallthru
    _
  %s196 = sadd.s32 0, 0
  %p197 = scmp.lt.s32.totalorder %s196, 0
  %s198 = scalar_select %p197, %s196, 0
  %s199 = smul.addr %s198, 4
  %s200 = scalar_lea.vmem %s5, %s199
  // Predicated region
  $region30: #{residual_block.4} parent=0 // pred_check
    _
  $region31: #{residual_block.4} parent=0 // pred_check_branch
    %202 = sbr.rel (0) target = $region33
  $region32: #{residual_block.4} parent=0 // pred_region
    %s203 = sadd.s32 0, 0
  $region33: #{residual_block.4} parent=0 // pred_fallthru
    _
  // Predicated region
  $region34: #{residual_block.4} parent=0 // pred_check
    _
  $region35: #{residual_block.4} parent=0 // pred_check_branch
    %205 = sbr.rel (0) target = $region37
  $region36: #{residual_block.4} parent=0 // pred_region
    _
  $region37: #{residual_block.4} parent=0 // pred_fallthru
    _
  // Predicated region
  $region38: #{residual_block.4} parent=0 // pred_check
    _
  $region39: #{residual_block.4} parent=0 // pred_check_branch
    %207 = sbr.rel (0) target = $region41
  $region40: #{residual_block.4} parent=0 // pred_region
    %s208 = sadd.s32 0, 0
    %p209 = scmp.lt.s32.totalorder %s208, 0
    %s210 = scalar_select %p209, %s208, 0
    %s211 = smul.addr %s210, 4
    %s212 = scalar_lea.vmem %s5, %s211
  $region41: #{residual_block.4} parent=0 // pred_fallthru
    _
  // Predicated region
  $region42: #{residual_block.4} parent=0 // pred_check
    _
  $region43: #{residual_block.4} parent=0 // pred_check_branch
    %214 = sbr.rel (0) target = $region45
  $region44: #{residual_block.4} parent=0 // pred_region
    _
  $region45: #{residual_block.4} parent=0 // pred_fallthru
    _

</llo_original>
